<compile_context>
chip_gen: v7x
topology: tpu7x:2x2x1
jax: 0.10.0
libtpu: 0.0.40
codegen_flags: <defaults>
</compile_context>

<pallas_src>
import jax
import jax.numpy as jnp
from jax.experimental import pallas as pl
from jax.experimental.pallas import tpu as pltpu


# ------------------------- parameter preparation (wrapper-side) -------------------------

def _conv_banded(w, bias, gamma, beta, mean, var, w_out, pad_w, eps=1e-5):
    """Fold eval-mode BN into the conv and express it as KH banded row-matmuls.

    Padded activation rows are laid out lane-dense with index wi*Cin + ci.
    Output columns are ordered [even-w block | odd-w block], each block
    (w_out//2)*Cout wide with index wo*Cout + co, so a 2x2 max-pool in w is just
    a max of the two lane halves.

    Returns B: (KH, Wp*Cin, w_out*Cout) and shift: (1, (w_out//2)*Cout).
    """
    Cout, Cin, KH, KW = w.shape
    scale = gamma / jnp.sqrt(var + eps)
    wf = (w * scale[:, None, None, None]).astype(jnp.float32)        # (Cout,Cin,KH,KW)
    Wp = w_out + 2 * pad_w
    wi = jnp.arange(Wp)
    wo = jnp.arange(w_out)
    kw = wi[:, None] - wo[None, :]                                    # (Wp, w_out)
    valid = (kw >= 0) & (kw < KW)
    kwc = jnp.clip(kw, 0, KW - 1)
    g = wf[:, :, :, kwc] * valid[None, None, None, :, :]              # (Cout,Cin,KH,Wp,w_out)
    B = jnp.transpose(g, (2, 3, 1, 4, 0))                             # (KH,Wp,Cin,w_out,Cout)
    B = B.reshape(KH, Wp * Cin, w_out // 2, 2, Cout)
    B = jnp.transpose(B, (0, 1, 3, 2, 4)).reshape(KH, Wp * Cin, w_out * Cout)
    shift = (beta + scale * (bias - mean)).astype(jnp.float32)
    shift = jnp.tile(shift.reshape(1, Cout), (1, w_out // 2))         # (1, Wo*Cout)
    return B, shift


# ------------------------------------ fused forward ------------------------------------

@jax.jit
def simple_cnn_forward(x_nchw, params):
    """x_nchw: (N, 1, H, W) float32 (PyTorch layout).  Returns (N, num_classes)."""
    N, Cin0, H1, W1 = x_nchw.shape
    assert Cin0 == 1 and H1 % 8 == 0 and W1 % 8 == 0, "input must be (N, 1, 8k, 8k)"
    C1, C2, C3 = 16, 32, 64
    PH1, PW1 = 1, 2
    PH2, PW2 = 1, 2
    PH3, PW3 = 1, 1
    H2, W2 = H1 // 2, W1 // 2
    H3, W3 = H2 // 2, W2 // 2
    H4, W4 = H3 // 2, W3 // 2
    H1p, W1p = H1 + 2 * PH1, W1 + 2 * PW1
    H2p, W2p = H2 + 2 * PH2, W2 + 2 * PW2
    H3p, W3p = H3 + 2 * PH3, W3 + 2 * PW3

    nc = params["fc2_w"].shape[1]
    assert nc <= 128

    # ---- batch blocking: NB samples per grid step, batch folded into matmul M ----
    NB = N if N < 8 else 8
    Npad = ((N + NB - 1) // NB) * NB

    # ---- one-time parameter prep (tiny, wrapper-side) ----
    b1, s1 = _conv_banded(*params["conv1"], w_out=W1, pad_w=PW1)   # (3,20,256), (1,128)
    b2, s2 = _conv_banded(*params["conv2"], w_out=W2, pad_w=PW2)   # (3,192,256), (1,128)
    b3, s3 = _conv_banded(*params["conv3"], w_out=W3, pad_w=PW3)   # (3,192,256), (1,128)

    # fc1 rows permuted from torch's (C,H,W)-flatten order to the kernel's (h, w, c)
    # activation layout, and split per output row h (H4 dots of K = W4*C3).
    f1w = params["fc1_w"].reshape(C3, H4, W4, 128).transpose(1, 2, 0, 3)
    f1w = f1w.reshape(H4, W4 * C3, 128).astype(jnp.float32)
    f1b = params["fc1_b"].reshape(1, 128).astype(jnp.float32)
    # classifier padded to 128 lanes (zero columns); sliced back outside the kernel.
    f2w = jnp.zeros((128, 128), jnp.float32).at[:, :nc].set(params["fc2_w"])
    f2b = jnp.zeros((1, 128), jnp.float32).at[:, :nc].set(params["fc2_b"].reshape(1, nc))

    # input: squeeze Cin=1, zero-pad spatially (conv1 padding) and in batch.
    x = x_nchw.reshape(N, H1, W1).astype(jnp.float32)
    x = jnp.pad(x, ((0, Npad - N), (PH1, PH1), (PW1, PW1)))        # (Npad, H1p, W1p)

    def kernel(x_ref, b1_ref, s1_ref, b2_ref, s2_ref, b3_ref, s3_ref,
               f1w_ref, f1b_ref, f2w_ref, f2b_ref, o_ref,
               zs1, p2, zs2, p3, zs3):

        def conv_rows(p_ref, rows_h, b_ref):
            # sum over kh of (padded rows kh..kh+rows_h-1, lane-dense) @ banded weights;
            # chained dots into one f32 accumulator (MRB-friendly on v7x).
            z = None
            for kh in range(3):
                lhs = p_ref[:, kh:kh + rows_h, :]
                lhs = lhs.reshape(NB * rows_h, lhs.shape[-1])
                t = jnp.dot(lhs, b_ref[kh], preferred_element_type=jnp.float32)
                z = t if z is None else z + t
            return z                                # (NB*rows_h, W*Cout), [even-w | odd-w]

        def pool_shift_relu(z, zs_ref, rows_h, half, s_ref):
            # 2x2 max-pool; BN shift + ReLU applied after the max (monotone => exact).
            zw = jnp.maximum(z[:, :half], z[:, half:])             # w-pool: lane halves
            zs_ref[...] = zw
            r0 = zs_ref[pl.ds(0, (NB * rows_h) // 2, stride=2), :]
            r1 = zs_ref[pl.ds(1, (NB * rows_h) // 2, stride=2), :]
            m = jnp.maximum(r0, r1)                                 # h-pool: row pairs
            return jnp.maximum(m + s_ref[...], 0.0)                 # (NB*rows_h//2, half)

        def write_padded(p_ref, act, rows_h, w_cols, cin, ph, pw):
            # zero only the padding border; the interior is fully overwritten each step.
            kd = (w_cols + 2 * pw) * cin
            zr = jnp.zeros((NB, ph, kd), jnp.float32)
            zc = jnp.zeros((NB, rows_h, pw * cin), jnp.float32)
            p_ref[:, 0:ph, :] = zr
            p_ref[:, ph + rows_h:ph + rows_h + ph, :] = zr
            p_ref[:, ph:ph + rows_h, 0:pw * cin] = zc
            p_ref[:, ph:ph + rows_h, kd - pw * cin:kd] = zc
            p_ref[:, ph:ph + rows_h, pw * cin:(pw + w_cols) * cin] = (
                act.reshape(NB, rows_h, w_cols * cin))

        # ---- conv1 + BN + ReLU + pool (input already zero-padded in the wrapper) ----
        z1 = conv_rows(x_ref, H1, b1_ref)                     # (NB*H1, W1*C1)
        a1 = pool_shift_relu(z1, zs1, H1, W2 * C1, s1_ref)    # (NB*H2, W2*C1)

        # ---- conv2 + BN + ReLU + pool ----
        write_padded(p2, a1, H2, W2, C1, PH2, PW2)
        z2 = conv_rows(p2, H2, b2_ref)                        # (NB*H2, W2*C2)
        a2 = pool_shift_relu(z2, zs2, H2, W3 * C2, s2_ref)    # (NB*H3, W3*C2)

        # ---- conv3 + BN + ReLU + pool ----
        write_padded(p3, a2, H3, W3, C2, PH3, PW3)
        z3 = conv_rows(p3, H3, b3_ref)                        # (NB*H3, W3*C3)
        a3 = pool_shift_relu(z3, zs3, H3, W4 * C3, s3_ref)    # (NB*H4, W4*C3)

        # ---- Flatten -> Linear(128) -> ReLU -> Dropout(eval) -> Linear (padded to 128) ----
        a3r = a3.reshape(NB, H4, W4 * C3)
        hfc = jnp.dot(a3r[:, 0, :], f1w_ref[0], preferred_element_type=jnp.float32)
        for h in range(1, H4):
            hfc = hfc + jnp.dot(a3r[:, h, :], f1w_ref[h],
                                preferred_element_type=jnp.float32)
        hfc = jnp.maximum(hfc + f1b_ref[...], 0.0)
        # TODO(synk): Dropout(0.5) is eval-mode identity here; train-mode masking not implemented.
        out = jnp.dot(hfc, f2w_ref[...], preferred_element_type=jnp.float32) + f2b_ref[...]
        o_ref[...] = out.astype(o_ref.dtype)

    def _full(a):
        return pl.BlockSpec(a.shape, lambda n, nd=a.ndim: (0,) * nd)

    out = pl.pallas_call(
        kernel,
        out_shape=jax.ShapeDtypeStruct((Npad, 128), jnp.float32),
        grid=(Npad // NB,),
        in_specs=[
            pl.BlockSpec((NB, H1p, W1p), lambda n: (n, 0, 0)),
            _full(b1), _full(s1), _full(b2), _full(s2), _full(b3), _full(s3),
            _full(f1w), _full(f1b), _full(f2w), _full(f2b),
        ],
        out_specs=pl.BlockSpec((NB, 128), lambda n: (n, 0)),
        scratch_shapes=[
            pltpu.VMEM((NB * H1, W2 * C1), jnp.float32),     # zs1: pool buffer, layer 1
            pltpu.VMEM((NB, H2p, W2p * C1), jnp.float32),    # p2 : padded act, layer 2
            pltpu.VMEM((NB * H2, W3 * C2), jnp.float32),     # zs2: pool buffer, layer 2
            pltpu.VMEM((NB, H3p, W3p * C2), jnp.float32),    # p3 : padded act, layer 3
            pltpu.VMEM((NB * H3, W4 * C3), jnp.float32),     # zs3: pool buffer, layer 3
        ],
        compiler_params=pltpu.CompilerParams(
            dimension_semantics=("parallel",),
            vmem_limit_bytes=32 * 1024 * 1024),
    )(x, b1, s1, b2, s2, b3, s3, f1w, f1b, f2w, f2b)
    return out[:N, :nc]


# --------------------------------- pure-JAX reference ---------------------------------

@jax.jit
def _reference_forward(x_nchw, params):
    hi = jax.lax.Precision.HIGHEST

    def conv_block(x, w, b, gamma, beta, mean, var, pad):
        y = jax.lax.conv_general_dilated(
            x, w, window_strides=(1, 1),
            padding=[(pad[0], pad[0]), (pad[1], pad[1])],
            dimension_numbers=("NCHW", "OIHW", "NCHW"), precision=hi)
        y = y + b[None, :, None, None]
        scale = gamma / jnp.sqrt(var + 1e-5)
        y = scale[None, :, None, None] * (y - mean[None, :, None, None]) + beta[None, :, None, None]
        y = jnp.maximum(y, 0.0)
        n, c, h, w_ = y.shape
        return y.reshape(n, c, h // 2, 2, w_ // 2, 2).max(axis=(3, 5))

    y = conv_block(x_nchw, *params["conv1"], pad=(1, 2))
    y = conv_block(y, *params["conv2"], pad=(1, 2))
    y = conv_block(y, *params["conv3"], pad=(1, 1))
    y = y.reshape(y.shape[0], -1)
    y = jnp.maximum(jnp.dot(y, params["fc1_w"], precision=hi) + params["fc1_b"], 0.0)
    return jnp.dot(y, params["fc2_w"], precision=hi) + params["fc2_b"]


# ------------------------------------- parameters -------------------------------------

def init_params(key, num_mfcc, fixed_len, num_classes):
    keys = jax.random.split(key, 8)

    def conv_params(k, cout, cin, kh, kw):
        k1, k2, k3, k4, k5, k6 = jax.random.split(k, 6)
        fan_in = cin * kh * kw
        w = jax.random.normal(k1, (cout, cin, kh, kw), jnp.float32) / jnp.sqrt(fan_in)
        b = 0.1 * jax.random.normal(k2, (cout,), jnp.float32)
        gamma = 1.0 + 0.1 * jax.random.normal(k3, (cout,), jnp.float32)
        beta = 0.1 * jax.random.normal(k4, (cout,), jnp.float32)
        mean = 0.1 * jax.random.normal(k5, (cout,), jnp.float32)
        var = 1.0 + 0.1 * jnp.abs(jax.random.normal(k6, (cout,), jnp.float32))
        return (w, b, gamma, beta, mean, var)

    flattened = 64 * (num_mfcc // 8) * (fixed_len // 8)   # after three 2x2 max-pools
    return {
        "conv1": conv_params(keys[0], 16, 1, 3, 5),
        "conv2": conv_params(keys[1], 32, 16, 3, 5),
        "conv3": conv_params(keys[2], 64, 32, 3, 3),
        "fc1_w": jax.random.normal(keys[3], (flattened, 128), jnp.float32) / jnp.sqrt(flattened),
        "fc1_b": 0.1 * jax.random.normal(keys[4], (1, 128), jnp.float32),
        "fc2_w": jax.random.normal(keys[5], (128, num_classes), jnp.float32) / jnp.sqrt(128.0),
        "fc2_b": 0.1 * jax.random.normal(keys[6], (1, num_classes), jnp.float32),
    }


if __name__ == "__main__":
    num_mfcc_coeffs, fixed_length, num_classes, batch = 16, 16, 10, 2
    x = jax.random.normal(jax.random.PRNGKey(0),
                          (batch, 1, num_mfcc_coeffs, fixed_length), jnp.float32)
    params = init_params(jax.random.PRNGKey(42), num_mfcc_coeffs, fixed_length, num_classes)

    out = simple_cnn_forward(x, params)
    out = jax.block_until_ready(out)
    assert out.shape == (batch, num_classes), out.shape

    ref = jax.block_until_ready(_reference_forward(x, params))
    assert bool(jnp.allclose(out, ref, rtol=3e-2, atol=3e-2)), "mismatch vs reference"

    print("KERNEL_OK")
</pallas_src>

<mosaic_0001>
module attributes {stable_mosaic.version = 11 : i64} {
  func.func @kernel(%arg0: i32, %arg1: memref<2x18x20xf32, #tpu.memory_space<vmem>>, %arg2: memref<3x20x256xf32, #tpu.memory_space<vmem>>, %arg3: memref<1x128xf32, #tpu.memory_space<vmem>>, %arg4: memref<3x192x256xf32, #tpu.memory_space<vmem>>, %arg5: memref<1x128xf32, #tpu.memory_space<vmem>>, %arg6: memref<3x192x256xf32, #tpu.memory_space<vmem>>, %arg7: memref<1x128xf32, #tpu.memory_space<vmem>>, %arg8: memref<2x128x128xf32, #tpu.memory_space<vmem>>, %arg9: memref<1x128xf32, #tpu.memory_space<vmem>>, %arg10: memref<128x128xf32, #tpu.memory_space<vmem>>, %arg11: memref<1x128xf32, #tpu.memory_space<vmem>>, %arg12: memref<2x128xf32, #tpu.memory_space<vmem>>, %arg13: memref<32x128xf32, #tpu.memory_space<vmem>>, %arg14: memref<2x10x192xf32, #tpu.memory_space<vmem>>, %arg15: memref<16x128xf32, #tpu.memory_space<vmem>>, %arg16: memref<2x6x192xf32, #tpu.memory_space<vmem>>, %arg17: memref<8x128xf32, #tpu.memory_space<vmem>>) attributes {dimension_semantics = [#tpu.dimension_semantics<parallel>], iteration_bounds = array<i64: 1>, scalar_prefetch = 0 : i64, scratch_operands = 5 : i64, tpu.core_type = #tpu.core_type<tc>, window_params = [{transform_indices = @transform_0, window_bounds = array<i64: 2, 18, 20>}, {pipeline_mode = #tpu.pipeline_mode<synchronous>, transform_indices = @transform_1, window_bounds = array<i64: 3, 20, 256>}, {pipeline_mode = #tpu.pipeline_mode<synchronous>, transform_indices = @transform_2, window_bounds = array<i64: 1, 128>}, {pipeline_mode = #tpu.pipeline_mode<synchronous>, transform_indices = @transform_3, window_bounds = array<i64: 3, 192, 256>}, {pipeline_mode = #tpu.pipeline_mode<synchronous>, transform_indices = @transform_4, window_bounds = array<i64: 1, 128>}, {pipeline_mode = #tpu.pipeline_mode<synchronous>, transform_indices = @transform_5, window_bounds = array<i64: 3, 192, 256>}, {pipeline_mode = #tpu.pipeline_mode<synchronous>, transform_indices = @transform_6, window_bounds = array<i64: 1, 128>}, {pipeline_mode = #tpu.pipeline_mode<synchronous>, transform_indices = @transform_7, window_bounds = array<i64: 2, 128, 128>}, {pipeline_mode = #tpu.pipeline_mode<synchronous>, transform_indices = @transform_8, window_bounds = array<i64: 1, 128>}, {pipeline_mode = #tpu.pipeline_mode<synchronous>, transform_indices = @transform_9, window_bounds = array<i64: 128, 128>}, {pipeline_mode = #tpu.pipeline_mode<synchronous>, transform_indices = @transform_10, window_bounds = array<i64: 1, 128>}, {transform_indices = @transform_11, window_bounds = array<i64: 2, 128>}]} {
    %c0 = arith.constant 0 : index
    %c0_0 = arith.constant 0 : index
    %c0_1 = arith.constant 0 : index
    %0 = vector.load %arg1[%c0, %c0_0, %c0_1] : memref<2x18x20xf32, #tpu.memory_space<vmem>>, vector<2x16x20xf32>
    %1 = vector.shape_cast %0 : vector<2x16x20xf32> to vector<32x20xf32>
    %c0_2 = arith.constant 0 : index
    %c0_3 = arith.constant 0 : index
    %c0_4 = arith.constant 0 : index
    %2 = vector.load %arg2[%c0_2, %c0_3, %c0_4] : memref<3x20x256xf32, #tpu.memory_space<vmem>>, vector<1x20x256xf32>
    %3 = vector.shape_cast %2 : vector<1x20x256xf32> to vector<20x256xf32>
    %cst = arith.constant dense<0.000000e+00> : vector<32x256xf32>
    %4 = tpu.matmul %1, %3, %cst {dimension_numbers = #tpu.dot_dimension_numbers<[1], [0], [0], [1], [0, 0, 1, 1], [], []>} : vector<32x20xf32>, vector<20x256xf32>, vector<32x256xf32> -> vector<32x256xf32>
    %c0_5 = arith.constant 0 : index
    %c1 = arith.constant 1 : index
    %c0_6 = arith.constant 0 : index
    %5 = vector.load %arg1[%c0_5, %c1, %c0_6] : memref<2x18x20xf32, #tpu.memory_space<vmem>>, vector<2x16x20xf32>
    %6 = vector.shape_cast %5 : vector<2x16x20xf32> to vector<32x20xf32>
    %c1_7 = arith.constant 1 : index
    %c0_8 = arith.constant 0 : index
    %c0_9 = arith.constant 0 : index
    %7 = vector.load %arg2[%c1_7, %c0_8, %c0_9] : memref<3x20x256xf32, #tpu.memory_space<vmem>>, vector<1x20x256xf32>
    %8 = vector.shape_cast %7 : vector<1x20x256xf32> to vector<20x256xf32>
    %cst_10 = arith.constant dense<0.000000e+00> : vector<32x256xf32>
    %9 = tpu.matmul %6, %8, %cst_10 {dimension_numbers = #tpu.dot_dimension_numbers<[1], [0], [0], [1], [0, 0, 1, 1], [], []>} : vector<32x20xf32>, vector<20x256xf32>, vector<32x256xf32> -> vector<32x256xf32>
    %10 = arith.addf %4, %9 : vector<32x256xf32>
    %c0_11 = arith.constant 0 : index
    %c2 = arith.constant 2 : index
    %c0_12 = arith.constant 0 : index
    %11 = vector.load %arg1[%c0_11, %c2, %c0_12] : memref<2x18x20xf32, #tpu.memory_space<vmem>>, vector<2x16x20xf32>
    %12 = vector.shape_cast %11 : vector<2x16x20xf32> to vector<32x20xf32>
    %c2_13 = arith.constant 2 : index
    %c0_14 = arith.constant 0 : index
    %c0_15 = arith.constant 0 : index
    %13 = vector.load %arg2[%c2_13, %c0_14, %c0_15] : memref<3x20x256xf32, #tpu.memory_space<vmem>>, vector<1x20x256xf32>
    %14 = vector.shape_cast %13 : vector<1x20x256xf32> to vector<20x256xf32>
    %cst_16 = arith.constant dense<0.000000e+00> : vector<32x256xf32>
    %15 = tpu.matmul %12, %14, %cst_16 {dimension_numbers = #tpu.dot_dimension_numbers<[1], [0], [0], [1], [0, 0, 1, 1], [], []>} : vector<32x20xf32>, vector<20x256xf32>, vector<32x256xf32> -> vector<32x256xf32>
    %16 = arith.addf %10, %15 : vector<32x256xf32>
    %17 = vector.extract_strided_slice %16 {offsets = [0, 0], sizes = [32, 128], strides = [1, 1]} : vector<32x256xf32> to vector<32x128xf32>
    %18 = vector.extract_strided_slice %16 {offsets = [0, 128], sizes = [32, 128], strides = [1, 1]} : vector<32x256xf32> to vector<32x128xf32>
    %19 = arith.maximumf %17, %18 : vector<32x128xf32>
    %c0_17 = arith.constant 0 : index
    %c0_18 = arith.constant 0 : index
    %20 = vector.load %arg13[%c0_17, %c0_18] : memref<32x128xf32, #tpu.memory_space<vmem>>, vector<32x128xf32>
    tpu.vector_store %arg13[%c0_17, %c0_18], %19 {strides = array<i32>} : memref<32x128xf32, #tpu.memory_space<vmem>>, vector<32x128xf32>,
    %c0_19 = arith.constant 0 : index
    %c0_20 = arith.constant 0 : index
    %21 = tpu.strided_load %arg13[%c0_19, %c0_20] {strides = array<i32: 2, 1>} : memref<32x128xf32, #tpu.memory_space<vmem>>, vector<16x128xf32>
    %c1_21 = arith.constant 1 : index
    %c0_22 = arith.constant 0 : index
    %22 = tpu.strided_load %arg13[%c1_21, %c0_22] {strides = array<i32: 2, 1>} : memref<32x128xf32, #tpu.memory_space<vmem>>, vector<16x128xf32>
    %23 = arith.maximumf %21, %22 : vector<16x128xf32>
    %c0_23 = arith.constant 0 : index
    %c0_24 = arith.constant 0 : index
    %24 = vector.load %arg3[%c0_23, %c0_24] : memref<1x128xf32, #tpu.memory_space<vmem>>, vector<1x128xf32>
    %25 = vector.broadcast %24 : vector<1x128xf32> to vector<16x128xf32>
    %26 = arith.addf %23, %25 : vector<16x128xf32>
    %cst_25 = arith.constant 0.000000e+00 : f32
    %27 = vector.broadcast %cst_25 : f32 to vector<16x128xf32>
    %28 = arith.maximumf %26, %27 : vector<16x128xf32>
    %cst_26 = arith.constant 0.000000e+00 : f32
    %29 = vector.broadcast %cst_26 : f32 to vector<2x1x192xf32>
    %cst_27 = arith.constant 0.000000e+00 : f32
    %30 = vector.broadcast %cst_27 : f32 to vector<2x8x32xf32>
    %c0_28 = arith.constant 0 : index
    %c0_29 = arith.constant 0 : index
    %c0_30 = arith.constant 0 : index
    %31 = vector.load %arg14[%c0_28, %c0_29, %c0_30] : memref<2x10x192xf32, #tpu.memory_space<vmem>>, vector<2x1x192xf32>
    tpu.vector_store %arg14[%c0_28, %c0_29, %c0_30], %29 {strides = array<i32>} : memref<2x10x192xf32, #tpu.memory_space<vmem>>, vector<2x1x192xf32>,
    %c0_31 = arith.constant 0 : index
    %c9 = arith.constant 9 : index
    %c0_32 = arith.constant 0 : index
    %32 = vector.load %arg14[%c0_31, %c9, %c0_32] : memref<2x10x192xf32, #tpu.memory_space<vmem>>, vector<2x1x192xf32>
    tpu.vector_store %arg14[%c0_31, %c9, %c0_32], %29 {strides = array<i32>} : memref<2x10x192xf32, #tpu.memory_space<vmem>>, vector<2x1x192xf32>,
    %c0_33 = arith.constant 0 : index
    %c1_34 = arith.constant 1 : index
    %c0_35 = arith.constant 0 : index
    %33 = vector.load %arg14[%c0_33, %c1_34, %c0_35] : memref<2x10x192xf32, #tpu.memory_space<vmem>>, vector<2x8x32xf32>
    tpu.vector_store %arg14[%c0_33, %c1_34, %c0_35], %30 {strides = array<i32>} : memref<2x10x192xf32, #tpu.memory_space<vmem>>, vector<2x8x32xf32>,
    %c0_36 = arith.constant 0 : index
    %c1_37 = arith.constant 1 : index
    %c160 = arith.constant 160 : index
    %34 = vector.load %arg14[%c0_36, %c1_37, %c160] : memref<2x10x192xf32, #tpu.memory_space<vmem>>, vector<2x8x32xf32>
    tpu.vector_store %arg14[%c0_36, %c1_37, %c160], %30 {strides = array<i32>} : memref<2x10x192xf32, #tpu.memory_space<vmem>>, vector<2x8x32xf32>,
    %35 = vector.shape_cast %28 : vector<16x128xf32> to vector<2x8x128xf32>
    %c0_38 = arith.constant 0 : index
    %c1_39 = arith.constant 1 : index
    %c32 = arith.constant 32 : index
    %36 = vector.load %arg14[%c0_38, %c1_39, %c32] : memref<2x10x192xf32, #tpu.memory_space<vmem>>, vector<2x8x128xf32>
    tpu.vector_store %arg14[%c0_38, %c1_39, %c32], %35 {strides = array<i32>} : memref<2x10x192xf32, #tpu.memory_space<vmem>>, vector<2x8x128xf32>,
    %c0_40 = arith.constant 0 : index
    %c0_41 = arith.constant 0 : index
    %c0_42 = arith.constant 0 : index
    %37 = vector.load %arg14[%c0_40, %c0_41, %c0_42] : memref<2x10x192xf32, #tpu.memory_space<vmem>>, vector<2x8x192xf32>
    %38 = vector.shape_cast %37 : vector<2x8x192xf32> to vector<16x192xf32>
    %c0_43 = arith.constant 0 : index
    %c0_44 = arith.constant 0 : index
    %c0_45 = arith.constant 0 : index
    %39 = vector.load %arg4[%c0_43, %c0_44, %c0_45] : memref<3x192x256xf32, #tpu.memory_space<vmem>>, vector<1x192x256xf32>
    %40 = vector.shape_cast %39 : vector<1x192x256xf32> to vector<192x256xf32>
    %cst_46 = arith.constant dense<0.000000e+00> : vector<16x256xf32>
    %41 = tpu.matmul %38, %40, %cst_46 {dimension_numbers = #tpu.dot_dimension_numbers<[1], [0], [0], [1], [0, 0, 1, 1], [], []>} : vector<16x192xf32>, vector<192x256xf32>, vector<16x256xf32> -> vector<16x256xf32>
    %c0_47 = arith.constant 0 : index
    %c1_48 = arith.constant 1 : index
    %c0_49 = arith.constant 0 : index
    %42 = vector.load %arg14[%c0_47, %c1_48, %c0_49] : memref<2x10x192xf32, #tpu.memory_space<vmem>>, vector<2x8x192xf32>
    %43 = vector.shape_cast %42 : vector<2x8x192xf32> to vector<16x192xf32>
    %c1_50 = arith.constant 1 : index
    %c0_51 = arith.constant 0 : index
    %c0_52 = arith.constant 0 : index
    %44 = vector.load %arg4[%c1_50, %c0_51, %c0_52] : memref<3x192x256xf32, #tpu.memory_space<vmem>>, vector<1x192x256xf32>
    %45 = vector.shape_cast %44 : vector<1x192x256xf32> to vector<192x256xf32>
    %cst_53 = arith.constant dense<0.000000e+00> : vector<16x256xf32>
    %46 = tpu.matmul %43, %45, %cst_53 {dimension_numbers = #tpu.dot_dimension_numbers<[1], [0], [0], [1], [0, 0, 1, 1], [], []>} : vector<16x192xf32>, vector<192x256xf32>, vector<16x256xf32> -> vector<16x256xf32>
    %47 = arith.addf %41, %46 : vector<16x256xf32>
    %c0_54 = arith.constant 0 : index
    %c2_55 = arith.constant 2 : index
    %c0_56 = arith.constant 0 : index
    %48 = vector.load %arg14[%c0_54, %c2_55, %c0_56] : memref<2x10x192xf32, #tpu.memory_space<vmem>>, vector<2x8x192xf32>
    %49 = vector.shape_cast %48 : vector<2x8x192xf32> to vector<16x192xf32>
    %c2_57 = arith.constant 2 : index
    %c0_58 = arith.constant 0 : index
    %c0_59 = arith.constant 0 : index
    %50 = vector.load %arg4[%c2_57, %c0_58, %c0_59] : memref<3x192x256xf32, #tpu.memory_space<vmem>>, vector<1x192x256xf32>
    %51 = vector.shape_cast %50 : vector<1x192x256xf32> to vector<192x256xf32>
    %cst_60 = arith.constant dense<0.000000e+00> : vector<16x256xf32>
    %52 = tpu.matmul %49, %51, %cst_60 {dimension_numbers = #tpu.dot_dimension_numbers<[1], [0], [0], [1], [0, 0, 1, 1], [], []>} : vector<16x192xf32>, vector<192x256xf32>, vector<16x256xf32> -> vector<16x256xf32>
    %53 = arith.addf %47, %52 : vector<16x256xf32>
    %54 = vector.extract_strided_slice %53 {offsets = [0, 0], sizes = [16, 128], strides = [1, 1]} : vector<16x256xf32> to vector<16x128xf32>
    %55 = vector.extract_strided_slice %53 {offsets = [0, 128], sizes = [16, 128], strides = [1, 1]} : vector<16x256xf32> to vector<16x128xf32>
    %56 = arith.maximumf %54, %55 : vector<16x128xf32>
    %c0_61 = arith.constant 0 : index
    %c0_62 = arith.constant 0 : index
    %57 = vector.load %arg15[%c0_61, %c0_62] : memref<16x128xf32, #tpu.memory_space<vmem>>, vector<16x128xf32>
    tpu.vector_store %arg15[%c0_61, %c0_62], %56 {strides = array<i32>} : memref<16x128xf32, #tpu.memory_space<vmem>>, vector<16x128xf32>,
    %c0_63 = arith.constant 0 : index
    %c0_64 = arith.constant 0 : index
    %58 = tpu.strided_load %arg15[%c0_63, %c0_64] {strides = array<i32: 2, 1>} : memref<16x128xf32, #tpu.memory_space<vmem>>, vector<8x128xf32>
    %c1_65 = arith.constant 1 : index
    %c0_66 = arith.constant 0 : index
    %59 = tpu.strided_load %arg15[%c1_65, %c0_66] {strides = array<i32: 2, 1>} : memref<16x128xf32, #tpu.memory_space<vmem>>, vector<8x128xf32>
    %60 = arith.maximumf %58, %59 : vector<8x128xf32>
    %c0_67 = arith.constant 0 : index
    %c0_68 = arith.constant 0 : index
    %61 = vector.load %arg5[%c0_67, %c0_68] : memref<1x128xf32, #tpu.memory_space<vmem>>, vector<1x128xf32>
    %62 = vector.broadcast %61 : vector<1x128xf32> to vector<8x128xf32>
    %63 = arith.addf %60, %62 : vector<8x128xf32>
    %cst_69 = arith.constant 0.000000e+00 : f32
    %64 = vector.broadcast %cst_69 : f32 to vector<8x128xf32>
    %65 = arith.maximumf %63, %64 : vector<8x128xf32>
    %cst_70 = arith.constant 0.000000e+00 : f32
    %66 = vector.broadcast %cst_70 : f32 to vector<2x1x192xf32>
    %cst_71 = arith.constant 0.000000e+00 : f32
    %67 = vector.broadcast %cst_71 : f32 to vector<2x4x32xf32>
    %c0_72 = arith.constant 0 : index
    %c0_73 = arith.constant 0 : index
    %c0_74 = arith.constant 0 : index
    %68 = vector.load %arg16[%c0_72, %c0_73, %c0_74] : memref<2x6x192xf32, #tpu.memory_space<vmem>>, vector<2x1x192xf32>
    tpu.vector_store %arg16[%c0_72, %c0_73, %c0_74], %66 {strides = array<i32>} : memref<2x6x192xf32, #tpu.memory_space<vmem>>, vector<2x1x192xf32>,
    %c0_75 = arith.constant 0 : index
    %c5 = arith.constant 5 : index
    %c0_76 = arith.constant 0 : index
    %69 = vector.load %arg16[%c0_75, %c5, %c0_76] : memref<2x6x192xf32, #tpu.memory_space<vmem>>, vector<2x1x192xf32>
    tpu.vector_store %arg16[%c0_75, %c5, %c0_76], %66 {strides = array<i32>} : memref<2x6x192xf32, #tpu.memory_space<vmem>>, vector<2x1x192xf32>,
    %c0_77 = arith.constant 0 : index
    %c1_78 = arith.constant 1 : index
    %c0_79 = arith.constant 0 : index
    %70 = vector.load %arg16[%c0_77, %c1_78, %c0_79] : memref<2x6x192xf32, #tpu.memory_space<vmem>>, vector<2x4x32xf32>
    tpu.vector_store %arg16[%c0_77, %c1_78, %c0_79], %67 {strides = array<i32>} : memref<2x6x192xf32, #tpu.memory_space<vmem>>, vector<2x4x32xf32>,
    %c0_80 = arith.constant 0 : index
    %c1_81 = arith.constant 1 : index
    %c160_82 = arith.constant 160 : index
    %71 = vector.load %arg16[%c0_80, %c1_81, %c160_82] : memref<2x6x192xf32, #tpu.memory_space<vmem>>, vector<2x4x32xf32>
    tpu.vector_store %arg16[%c0_80, %c1_81, %c160_82], %67 {strides = array<i32>} : memref<2x6x192xf32, #tpu.memory_space<vmem>>, vector<2x4x32xf32>,
    %72 = vector.shape_cast %65 : vector<8x128xf32> to vector<2x4x128xf32>
    %c0_83 = arith.constant 0 : index
    %c1_84 = arith.constant 1 : index
    %c32_85 = arith.constant 32 : index
    %73 = vector.load %arg16[%c0_83, %c1_84, %c32_85] : memref<2x6x192xf32, #tpu.memory_space<vmem>>, vector<2x4x128xf32>
    tpu.vector_store %arg16[%c0_83, %c1_84, %c32_85], %72 {strides = array<i32>} : memref<2x6x192xf32, #tpu.memory_space<vmem>>, vector<2x4x128xf32>,
    %c0_86 = arith.constant 0 : index
    %c0_87 = arith.constant 0 : index
    %c0_88 = arith.constant 0 : index
    %74 = vector.load %arg16[%c0_86, %c0_87, %c0_88] : memref<2x6x192xf32, #tpu.memory_space<vmem>>, vector<2x4x192xf32>
    %75 = vector.shape_cast %74 : vector<2x4x192xf32> to vector<8x192xf32>
    %c0_89 = arith.constant 0 : index
    %c0_90 = arith.constant 0 : index
    %c0_91 = arith.constant 0 : index
    %76 = vector.load %arg6[%c0_89, %c0_90, %c0_91] : memref<3x192x256xf32, #tpu.memory_space<vmem>>, vector<1x192x256xf32>
    %77 = vector.shape_cast %76 : vector<1x192x256xf32> to vector<192x256xf32>
    %cst_92 = arith.constant dense<0.000000e+00> : vector<8x256xf32>
    %78 = tpu.matmul %75, %77, %cst_92 {dimension_numbers = #tpu.dot_dimension_numbers<[1], [0], [0], [1], [0, 0, 1, 1], [], []>} : vector<8x192xf32>, vector<192x256xf32>, vector<8x256xf32> -> vector<8x256xf32>
    %c0_93 = arith.constant 0 : index
    %c1_94 = arith.constant 1 : index
    %c0_95 = arith.constant 0 : index
    %79 = vector.load %arg16[%c0_93, %c1_94, %c0_95] : memref<2x6x192xf32, #tpu.memory_space<vmem>>, vector<2x4x192xf32>
    %80 = vector.shape_cast %79 : vector<2x4x192xf32> to vector<8x192xf32>
    %c1_96 = arith.constant 1 : index
    %c0_97 = arith.constant 0 : index
    %c0_98 = arith.constant 0 : index
    %81 = vector.load %arg6[%c1_96, %c0_97, %c0_98] : memref<3x192x256xf32, #tpu.memory_space<vmem>>, vector<1x192x256xf32>
    %82 = vector.shape_cast %81 : vector<1x192x256xf32> to vector<192x256xf32>
    %cst_99 = arith.constant dense<0.000000e+00> : vector<8x256xf32>
    %83 = tpu.matmul %80, %82, %cst_99 {dimension_numbers = #tpu.dot_dimension_numbers<[1], [0], [0], [1], [0, 0, 1, 1], [], []>} : vector<8x192xf32>, vector<192x256xf32>, vector<8x256xf32> -> vector<8x256xf32>
    %84 = arith.addf %78, %83 : vector<8x256xf32>
    %c0_100 = arith.constant 0 : index
    %c2_101 = arith.constant 2 : index
    %c0_102 = arith.constant 0 : index
    %85 = vector.load %arg16[%c0_100, %c2_101, %c0_102] : memref<2x6x192xf32, #tpu.memory_space<vmem>>, vector<2x4x192xf32>
    %86 = vector.shape_cast %85 : vector<2x4x192xf32> to vector<8x192xf32>
    %c2_103 = arith.constant 2 : index
    %c0_104 = arith.constant 0 : index
    %c0_105 = arith.constant 0 : index
    %87 = vector.load %arg6[%c2_103, %c0_104, %c0_105] : memref<3x192x256xf32, #tpu.memory_space<vmem>>, vector<1x192x256xf32>
    %88 = vector.shape_cast %87 : vector<1x192x256xf32> to vector<192x256xf32>
    %cst_106 = arith.constant dense<0.000000e+00> : vector<8x256xf32>
    %89 = tpu.matmul %86, %88, %cst_106 {dimension_numbers = #tpu.dot_dimension_numbers<[1], [0], [0], [1], [0, 0, 1, 1], [], []>} : vector<8x192xf32>, vector<192x256xf32>, vector<8x256xf32> -> vector<8x256xf32>
    %90 = arith.addf %84, %89 : vector<8x256xf32>
    %91 = vector.extract_strided_slice %90 {offsets = [0, 0], sizes = [8, 128], strides = [1, 1]} : vector<8x256xf32> to vector<8x128xf32>
    %92 = vector.extract_strided_slice %90 {offsets = [0, 128], sizes = [8, 128], strides = [1, 1]} : vector<8x256xf32> to vector<8x128xf32>
    %93 = arith.maximumf %91, %92 : vector<8x128xf32>
    %c0_107 = arith.constant 0 : index
    %c0_108 = arith.constant 0 : index
    %94 = vector.load %arg17[%c0_107, %c0_108] : memref<8x128xf32, #tpu.memory_space<vmem>>, vector<8x128xf32>
    tpu.vector_store %arg17[%c0_107, %c0_108], %93 {strides = array<i32>} : memref<8x128xf32, #tpu.memory_space<vmem>>, vector<8x128xf32>,
    %c0_109 = arith.constant 0 : index
    %c0_110 = arith.constant 0 : index
    %95 = tpu.strided_load %arg17[%c0_109, %c0_110] {strides = array<i32: 2, 1>} : memref<8x128xf32, #tpu.memory_space<vmem>>, vector<4x128xf32>
    %c1_111 = arith.constant 1 : index
    %c0_112 = arith.constant 0 : index
    %96 = tpu.strided_load %arg17[%c1_111, %c0_112] {strides = array<i32: 2, 1>} : memref<8x128xf32, #tpu.memory_space<vmem>>, vector<4x128xf32>
    %97 = arith.maximumf %95, %96 : vector<4x128xf32>
    %c0_113 = arith.constant 0 : index
    %c0_114 = arith.constant 0 : index
    %98 = vector.load %arg7[%c0_113, %c0_114] : memref<1x128xf32, #tpu.memory_space<vmem>>, vector<1x128xf32>
    %99 = vector.broadcast %98 : vector<1x128xf32> to vector<4x128xf32>
    %100 = arith.addf %97, %99 : vector<4x128xf32>
    %cst_115 = arith.constant 0.000000e+00 : f32
    %101 = vector.broadcast %cst_115 : f32 to vector<4x128xf32>
    %102 = arith.maximumf %100, %101 : vector<4x128xf32>
    %103 = vector.shape_cast %102 : vector<4x128xf32> to vector<2x2x128xf32>
    %104 = vector.extract_strided_slice %103 {offsets = [0, 0, 0], sizes = [2, 1, 128], strides = [1, 1, 1]} : vector<2x2x128xf32> to vector<2x1x128xf32>
    %105 = vector.shape_cast %104 : vector<2x1x128xf32> to vector<2x128xf32>
    %c0_116 = arith.constant 0 : index
    %c0_117 = arith.constant 0 : index
    %c0_118 = arith.constant 0 : index
    %106 = vector.load %arg8[%c0_116, %c0_117, %c0_118] : memref<2x128x128xf32, #tpu.memory_space<vmem>>, vector<1x128x128xf32>
    %107 = vector.shape_cast %106 : vector<1x128x128xf32> to vector<128x128xf32>
    %cst_119 = arith.constant dense<0.000000e+00> : vector<2x128xf32>
    %108 = tpu.matmul %105, %107, %cst_119 {dimension_numbers = #tpu.dot_dimension_numbers<[1], [0], [0], [1], [0, 0, 1, 1], [], []>} : vector<2x128xf32>, vector<128x128xf32>, vector<2x128xf32> -> vector<2x128xf32>
    %109 = vector.extract_strided_slice %103 {offsets = [0, 1, 0], sizes = [2, 1, 128], strides = [1, 1, 1]} : vector<2x2x128xf32> to vector<2x1x128xf32>
    %110 = vector.shape_cast %109 : vector<2x1x128xf32> to vector<2x128xf32>
    %c1_120 = arith.constant 1 : index
    %c0_121 = arith.constant 0 : index
    %c0_122 = arith.constant 0 : index
    %111 = vector.load %arg8[%c1_120, %c0_121, %c0_122] : memref<2x128x128xf32, #tpu.memory_space<vmem>>, vector<1x128x128xf32>
    %112 = vector.shape_cast %111 : vector<1x128x128xf32> to vector<128x128xf32>
    %cst_123 = arith.constant dense<0.000000e+00> : vector<2x128xf32>
    %113 = tpu.matmul %110, %112, %cst_123 {dimension_numbers = #tpu.dot_dimension_numbers<[1], [0], [0], [1], [0, 0, 1, 1], [], []>} : vector<2x128xf32>, vector<128x128xf32>, vector<2x128xf32> -> vector<2x128xf32>
    %114 = arith.addf %108, %113 : vector<2x128xf32>
    %c0_124 = arith.constant 0 : index
    %c0_125 = arith.constant 0 : index
    %115 = vector.load %arg9[%c0_124, %c0_125] : memref<1x128xf32, #tpu.memory_space<vmem>>, vector<1x128xf32>
    %116 = vector.broadcast %115 : vector<1x128xf32> to vector<2x128xf32>
    %117 = arith.addf %114, %116 : vector<2x128xf32>
    %cst_126 = arith.constant 0.000000e+00 : f32
    %118 = vector.broadcast %cst_126 : f32 to vector<2x128xf32>
    %119 = arith.maximumf %117, %118 : vector<2x128xf32>
    %c0_127 = arith.constant 0 : index
    %c0_128 = arith.constant 0 : index
    %120 = vector.load %arg10[%c0_127, %c0_128] : memref<128x128xf32, #tpu.memory_space<vmem>>, vector<128x128xf32>
    %cst_129 = arith.constant dense<0.000000e+00> : vector<2x128xf32>
    %121 = tpu.matmul %119, %120, %cst_129 {dimension_numbers = #tpu.dot_dimension_numbers<[1], [0], [0], [1], [0, 0, 1, 1], [], []>} : vector<2x128xf32>, vector<128x128xf32>, vector<2x128xf32> -> vector<2x128xf32>
    %c0_130 = arith.constant 0 : index
    %c0_131 = arith.constant 0 : index
    %122 = vector.load %arg11[%c0_130, %c0_131] : memref<1x128xf32, #tpu.memory_space<vmem>>, vector<1x128xf32>
    %123 = vector.broadcast %122 : vector<1x128xf32> to vector<2x128xf32>
    %124 = arith.addf %121, %123 : vector<2x128xf32>
    %c0_132 = arith.constant 0 : index
    %c0_133 = arith.constant 0 : index
    %125 = vector.load %arg12[%c0_132, %c0_133] : memref<2x128xf32, #tpu.memory_space<vmem>>, vector<2x128xf32>
    tpu.vector_store %arg12[%c0_132, %c0_133], %124 {strides = array<i32>} : memref<2x128xf32, #tpu.memory_space<vmem>>, vector<2x128xf32>,
    return
  }
  func.func @transform_0(%arg0: i32) -> (i32, i32, i32) {
    %c0_i32 = arith.constant 0 : i32
    %c0_i32_0 = arith.constant 0 : i32
    %c0_i32_1 = arith.constant 0 : i32
    return %arg0, %c0_i32, %c0_i32_0 : i32, i32, i32
  }
  func.func @transform_1(%arg0: i32) -> (i32, i32, i32) {
    %c0_i32 = arith.constant 0 : i32
    %c0_i32_0 = arith.constant 0 : i32
    %c0_i32_1 = arith.constant 0 : i32
    %c0_i32_2 = arith.constant 0 : i32
    return %c0_i32, %c0_i32_0, %c0_i32_1 : i32, i32, i32
  }
  func.func @transform_2(%arg0: i32) -> (i32, i32) {
    %c0_i32 = arith.constant 0 : i32
    %c0_i32_0 = arith.constant 0 : i32
    %c0_i32_1 = arith.constant 0 : i32
    return %c0_i32, %c0_i32_0 : i32, i32
  }
  func.func @transform_3(%arg0: i32) -> (i32, i32, i32) {
    %c0_i32 = arith.constant 0 : i32
    %c0_i32_0 = arith.constant 0 : i32
    %c0_i32_1 = arith.constant 0 : i32
    %c0_i32_2 = arith.constant 0 : i32
    return %c0_i32, %c0_i32_0, %c0_i32_1 : i32, i32, i32
  }
  func.func @transform_4(%arg0: i32) -> (i32, i32) {
    %c0_i32 = arith.constant 0 : i32
    %c0_i32_0 = arith.constant 0 : i32
    %c0_i32_1 = arith.constant 0 : i32
    return %c0_i32, %c0_i32_0 : i32, i32
  }
  func.func @transform_5(%arg0: i32) -> (i32, i32, i32) {
    %c0_i32 = arith.constant 0 : i32
    %c0_i32_0 = arith.constant 0 : i32
    %c0_i32_1 = arith.constant 0 : i32
    %c0_i32_2 = arith.constant 0 : i32
    return %c0_i32, %c0_i32_0, %c0_i32_1 : i32, i32, i32
  }
  func.func @transform_6(%arg0: i32) -> (i32, i32) {
    %c0_i32 = arith.constant 0 : i32
    %c0_i32_0 = arith.constant 0 : i32
    %c0_i32_1 = arith.constant 0 : i32
    return %c0_i32, %c0_i32_0 : i32, i32
  }
  func.func @transform_7(%arg0: i32) -> (i32, i32, i32) {
    %c0_i32 = arith.constant 0 : i32
    %c0_i32_0 = arith.constant 0 : i32
    %c0_i32_1 = arith.constant 0 : i32
    %c0_i32_2 = arith.constant 0 : i32
    return %c0_i32, %c0_i32_0, %c0_i32_1 : i32, i32, i32
  }
  func.func @transform_8(%arg0: i32) -> (i32, i32) {
    %c0_i32 = arith.constant 0 : i32
    %c0_i32_0 = arith.constant 0 : i32
    %c0_i32_1 = arith.constant 0 : i32
    return %c0_i32, %c0_i32_0 : i32, i32
  }
  func.func @transform_9(%arg0: i32) -> (i32, i32) {
    %c0_i32 = arith.constant 0 : i32
    %c0_i32_0 = arith.constant 0 : i32
    %c0_i32_1 = arith.constant 0 : i32
    return %c0_i32, %c0_i32_0 : i32, i32
  }
  func.func @transform_10(%arg0: i32) -> (i32, i32) {
    %c0_i32 = arith.constant 0 : i32
    %c0_i32_0 = arith.constant 0 : i32
    %c0_i32_1 = arith.constant 0 : i32
    return %c0_i32, %c0_i32_0 : i32, i32
  }
  func.func @transform_11(%arg0: i32) -> (i32, i32) {
    %c0_i32 = arith.constant 0 : i32
    %c0_i32_0 = arith.constant 0 : i32
    return %arg0, %c0_i32 : i32, i32
  }
}

</mosaic_0001>

<llo_original>
// kernel: simple_cnn_forward.1
$region0: #{simple_cnn_forward.1}
  #allocation0 [shape = 'u32[]', space=smem, size = 0x4, offset = 0x4, fixed_abs, tag = 'smem constant byte address 0x4 - core index']
  #allocation1 [shape = 'u32[144,128]{1,0:T(1,128)}', space=vmem, size = 0x12000, scoped, tag = 'internal scratch']
  #allocation2 [shape = 'f32[32,128]{1,0:T(8,128)}', space=vmem, size = 0x4000, scoped, tag = 'scratch operand']
  #allocation3 [shape = 'f32[2,10,192]{2,1,0:T(8,128)}', space=vmem, size = 0x8000, scoped, tag = 'scratch operand']
  #allocation4 [shape = 'f32[16,128]{1,0:T(8,128)}', space=vmem, size = 0x2000, scoped, tag = 'scratch operand']
  #allocation5 [shape = 'f32[2,6,192]{2,1,0:T(8,128)}', space=vmem, size = 0x4000, scoped, tag = 'scratch operand']
  #allocation6 [shape = 'f32[8,128]{1,0:T(8,128)}', space=vmem, size = 0x1000, scoped, tag = 'scratch operand']
  %s0 = inlined_call_operand.vmem [shape: f32[2,18,20], index: 0, kind: input, shape index: {}]
  %s1 = inlined_call_operand.vmem [shape: f32[3,20,256], index: 1, kind: input, shape index: {}]
  %s2 = inlined_call_operand.vmem [shape: f32[1,128], index: 2, kind: input, shape index: {}]
  %s3 = inlined_call_operand.vmem [shape: f32[3,192,256], index: 3, kind: input, shape index: {}]
  %s4 = inlined_call_operand.vmem [shape: f32[1,128], index: 4, kind: input, shape index: {}]
  %s5 = inlined_call_operand.vmem [shape: f32[3,192,256], index: 5, kind: input, shape index: {}]
  %s6 = inlined_call_operand.vmem [shape: f32[1,128], index: 6, kind: input, shape index: {}]
  %s7 = inlined_call_operand.vmem [shape: f32[2,128,128], index: 7, kind: input, shape index: {}]
  %s8 = inlined_call_operand.vmem [shape: f32[1,128], index: 8, kind: input, shape index: {}]
  %s9 = inlined_call_operand.vmem [shape: f32[128,128], index: 9, kind: input, shape index: {}]
  %s10 = inlined_call_operand.vmem [shape: f32[1,128], index: 10, kind: input, shape index: {}]
  %s11 = inlined_call_operand.hbm [shape: f32[2,128], index: 11, kind: output, shape index: {}]
  %s12 = sld [smem:[#allocation0]]
  $region54: #{simple_cnn_forward.1} parent=0
    _
  %s14 = ssub.s32 1, %s12
  %s15 = scalar_select 0, %s14, %s12
  $region1: #{simple_cnn_forward.1} parent=0
    #allocation7 [shape = 'u8[1024]{0}', space=vmem, size = 0x400, scoped, tag = 'output window, operand 0, single buffered']
    #allocation8 [shape = 's32[1]{0}', space=sflag, size = 0x4, scoped, tag = 'scoped memory for simple_cnn_forward.1']
    %16 = vsyncpa [#allocation8], 0
    // Predicated region
    $region2: #{simple_cnn_forward.1} parent=1 // pred_check
      _
    $region3: #{simple_cnn_forward.1} parent=1 // pred_check_branch
      %18 = sbr.rel (0) target = $region5
    $region4: #{simple_cnn_forward.1} parent=1 // pred_region
      _
    $region5: #{simple_cnn_forward.1} parent=1 // pred_fallthru
      _
    // Predicated region
    $region6: #{simple_cnn_forward.1} parent=1 // pred_check
      _
    $region7: #{simple_cnn_forward.1} parent=1 // pred_check_branch
      %20 = sbr.rel (0) target = $region9
    $region8: #{simple_cnn_forward.1} parent=1 // pred_region
      _
    $region9: #{simple_cnn_forward.1} parent=1 // pred_fallthru
      _
    // Predicated region
    $region10: #{simple_cnn_forward.1} parent=1 // pred_check
      _
    $region11: #{simple_cnn_forward.1} parent=1 // pred_check_branch
      %22 = sbr.rel (0) target = $region13
    $region12: #{simple_cnn_forward.1} parent=1 // pred_region
      _
    $region13: #{simple_cnn_forward.1} parent=1 // pred_fallthru
      _
    // Predicated region
    $region14: #{simple_cnn_forward.1} parent=1 // pred_check
      _
    $region15: #{simple_cnn_forward.1} parent=1 // pred_check_branch
      %24 = sbr.rel (0) target = $region17
    $region16: #{simple_cnn_forward.1} parent=1 // pred_region
      _
    $region17: #{simple_cnn_forward.1} parent=1 // pred_fallthru
      _
    // Predicated region
    $region18: #{simple_cnn_forward.1} parent=1 // pred_check
      _
    $region19: #{simple_cnn_forward.1} parent=1 // pred_check_branch
      %26 = sbr.rel (0) target = $region21
    $region20: #{simple_cnn_forward.1} parent=1 // pred_region
      _
    $region21: #{simple_cnn_forward.1} parent=1 // pred_fallthru
      _
    // Predicated region
    $region22: #{simple_cnn_forward.1} parent=1 // pred_check
      _
    $region23: #{simple_cnn_forward.1} parent=1 // pred_check_branch
      %28 = sbr.rel (0) target = $region25
    $region24: #{simple_cnn_forward.1} parent=1 // pred_region
      _
    $region25: #{simple_cnn_forward.1} parent=1 // pred_fallthru
      _
    // Predicated region
    $region26: #{simple_cnn_forward.1} parent=1 // pred_check
      _
    $region27: #{simple_cnn_forward.1} parent=1 // pred_check_branch
      %30 = sbr.rel (0) target = $region29
    $region28: #{simple_cnn_forward.1} parent=1 // pred_region
      _
    $region29: #{simple_cnn_forward.1} parent=1 // pred_fallthru
      _
    // Predicated region
    $region30: #{simple_cnn_forward.1} parent=1 // pred_check
      _
    $region31: #{simple_cnn_forward.1} parent=1 // pred_check_branch
      %32 = sbr.rel (0) target = $region33
    $region32: #{simple_cnn_forward.1} parent=1 // pred_region
      _
    $region33: #{simple_cnn_forward.1} parent=1 // pred_fallthru
      _
    // Predicated region
    $region34: #{simple_cnn_forward.1} parent=1 // pred_check
      _
    $region35: #{simple_cnn_forward.1} parent=1 // pred_check_branch
      %34 = sbr.rel (0) target = $region37
    $region36: #{simple_cnn_forward.1} parent=1 // pred_region
      _
    $region37: #{simple_cnn_forward.1} parent=1 // pred_fallthru
      _
    // Predicated region
    $region38: #{simple_cnn_forward.1} parent=1 // pred_check
      _
    $region39: #{simple_cnn_forward.1} parent=1 // pred_check_branch
      %36 = sbr.rel (0) target = $region41
    $region40: #{simple_cnn_forward.1} parent=1 // pred_region
      _
    $region41: #{simple_cnn_forward.1} parent=1 // pred_fallthru
      _
    // Predicated region
    $region42: #{simple_cnn_forward.1} parent=1 // pred_check
      _
    $region43: #{simple_cnn_forward.1} parent=1 // pred_check_branch
      %38 = sbr.rel (0) target = $region45
    $region44: #{simple_cnn_forward.1} parent=1 // pred_region
      _
    $region45: #{simple_cnn_forward.1} parent=1 // pred_fallthru
      _
    %v39 = vld [vmem:[%s0] sm:$0xff]
    %v40 = vld [vmem:[%s0 + $0x8] sm:$0xff]
    %v41 = vld [vmem:[%s0 + $0x18] sm:$0xff]
    %v42 = vld [vmem:[%s0 + $0x20] sm:$0xff]
    %v43 = vld [vmem:[%s1] sm:$0xff]
    %v44 = vld [vmem:[%s1 + $0x8] sm:$0xff]
    %v45 = vld [vmem:[%s1 + $0x10] sm:$0xff]
    %v46 = vld [vmem:[%s1 + $0x18] sm:$0xff]
    %v47 = vld [vmem:[%s1 + $0x20] sm:$0xf]
    %v48 = vld [vmem:[%s1 + $0x28] sm:$0xf]
    %v49 = vld [vmem:[%s0 + $0x1] sm:$0xff]
    %v50 = vld [vmem:[%s0 + $0x9] sm:$0xff]
    %v51 = vld [vmem:[%s0 + $0x19] sm:$0xff]
    %v52 = vld [vmem:[%s0 + $0x21] sm:$0xff]
    %s53 = scalar_lea.vmem %s1, 48
    %v54 = vld [vmem:[%s53] sm:$0xff]
    %v55 = vld [vmem:[%s53 + $0x8] sm:$0xff]
    %v56 = vld [vmem:[%s53 + $0x10] sm:$0xff]
    %v57 = vld [vmem:[%s53 + $0x18] sm:$0xff]
    %v58 = vld [vmem:[%s53 + $0x20] sm:$0xf]
    %v59 = vld [vmem:[%s53 + $0x28] sm:$0xf]
    %vm60 = vcmask 162816
    %v62 = vsel %vm60, %v49, 0
    %v65 = vsel %vm60, %v50, 0
    %v68 = vsel %vm60, %v51, 0
    %v71 = vsel %vm60, %v52, 0
    %vm73 = vcmask 1043456
    %v75 = vsel %vm73, %v58, 0
    %v78 = vsel %vm73, %v59, 0
    %80 = vmatprep.subr.mxu0 %v55
    %81 = vmatpush1.msra.mxu0 %v54
    %82 = vmatprep.subr.mxu0 %v57
    %83 = vmatpush1.msra.mxu0 %v56
    %84 = vmatprep.subr.mxu0 %v78
    %85 = vmatpush1.msra.mxu0 %v75
    %86 = vmatprep.subr.mxu0 0.0
    %87 = vmatpush1.msra.mxu0 0.0
    %88 = vmatprep.subr.mxu0 0.0
    %89 = vmatpush1.msra.mxu0 0.0
    %90 = vmatprep.subr.mxu0 0.0
    %91 = vmatpush1.msra.mxu0 0.0
    %92 = vmatprep.subr.mxu0 0.0
    %93 = vmatpush1.msra.mxu0 0.0
    %94 = vmatprep.subr.mxu0 0.0
    %95 = vmatpush1.msra.mxu0 0.0
    %96 = vmatprep.subr.mxu0 0.0
    %97 = vmatpush1.msra.mxu0 0.0
    %98 = vmatprep.subr.mxu0 0.0
    %99 = vmatpush1.msra.mxu0 0.0
    %100 = vmatprep.subr.mxu0 0.0
    %101 = vmatpush1.msra.mxu0 0.0
    %102 = vmatprep.subr.mxu0 0.0
    %103 = vmatpush1.msra.mxu0 0.0
    %104 = vmatprep.subr.mxu0 0.0
    %105 = vmatpush1.msra.mxu0 0.0
    %106 = vmatprep.subr.mxu0 0.0
    %107 = vmatpush1.msra.mxu0 0.0
    %108 = vmatprep.subr.mxu0 0.0
    %109 = vmatpush1.msra.mxu0 0.0
    %110 = vmatprep.subr.mxu0 0.0
    %111 = vmatpush1.msra.mxu0 0.0
    %112 = vmatprep.subr.mxu0 0.0
    %113 = vmatpush1.msra.mxu0 0.0
    %114 = vmatprep.subr.mxu0 0.0
    %115 = vmatpush1.msra.mxu0 0.0
    %116 = vmatprep.subr.mxu0 0.0
    %117 = vmatpush1.msra.mxu0 0.0
    %118 = vmatprep.subr.mxu0 0.0
    %119 = vmatpush1.msra.mxu0 0.0
    %120 = vmatprep.subr.mxu0 0.0
    %121 = vmatpush1.msra.mxu0 0.0
    %122 = vmatprep.subr.mxu0 0.0
    %123 = vmatpush1.msra.mxu0 0.0
    %124 = vmatprep.subr.mxu0 0.0
    %125 = vmatpush1.msra.mxu0 0.0
    %126 = vmatprep.subr.mxu0 0.0
    %127 = vmatpush1.msra.mxu0 0.0
    %128 = vmatprep.subr.mxu0 0.0
    %129 = vmatpush1.msra.mxu0 0.0
    %130 = vmatprep.subr.mxu0 0.0
    %131 = vmatpush1.msra.mxu0 0.0
    %132 = vmatprep.subr.mxu0 0.0
    %133 = vmatpush1.msra.mxu0 0.0
    %134 = vmatprep.subr.mxu0 0.0
    %135 = vmatpush1.msra.mxu0 0.0
    %136 = vmatprep.subr.mxu0 0.0
    %137 = vmatpush1.msra.mxu0 0.0
    %138 = vmatprep.subr.mxu0 0.0
    %139 = vmatpush1.msra.mxu0 0.0
    %140 = vmatprep.subr.mxu0 0.0
    %141 = vmatpush1.msra.mxu0 0.0
    %142 = vmatprep.subr.mxu0 0.0
    %143 = vmatpush1.msra.mxu0 0.0
    %144 = vmatprep.mubr.f32.mxu0 0.0
    %145 = vmatmul.mubr.f32.gmra.mrb[0].mxu0 %v62
    %v146 = vpop.f32.mrb[0].mxu0
    %v147 = vadd.f32 0.0, %v146
    %v148 = vpop.f32.mrb[0].mxu0
    %v149 = vadd.f32 0.0, %v148
    %150 = vmatprep.mubr.f32.mxu0 0.0
    %151 = vmatmul.mubr.f32.gmra.mrb[0].mxu0 %v65
    %v152 = vpop.f32.mrb[0].mxu0
    %v153 = vadd.f32 0.0, %v152
    %v154 = vpop.f32.mrb[0].mxu0
    %v155 = vadd.f32 0.0, %v154
    %156 = vmatprep.mubr.f32.mxu0 0.0
    %157 = vmatmul.mubr.f32.gmra.mrb[0].mxu0 %v68
    %v158 = vpop.f32.mrb[0].mxu0
    %v159 = vadd.f32 0.0, %v158
    %v160 = vpop.f32.mrb[0].mxu0
    %v161 = vadd.f32 0.0, %v160
    %162 = vmatprep.mubr.f32.mxu0 0.0
    %163 = vmatmul.mubr.f32.gmra.mrb[0].mxu0 %v71
    %v164 = vpop.f32.mrb[0].mxu0
    %v165 = vadd.f32 0.0, %v164
    %v166 = vpop.f32.mrb[0].mxu0
    %v167 = vadd.f32 0.0, %v166
    %168 = vdwg.mxu0
    %v170 = vsel %vm60, %v39, 0
    %v173 = vsel %vm60, %v40, 0
    %v176 = vsel %vm60, %v41, 0
    %v179 = vsel %vm60, %v42, 0
    %v182 = vsel %vm73, %v47, 0
    %v185 = vsel %vm73, %v48, 0
    %187 = vmatprep.subr.mxu0 %v44
    %188 = vmatpush1.msra.mxu0 %v43
    %189 = vmatprep.subr.mxu0 %v46
    %190 = vmatpush1.msra.mxu0 %v45
    %191 = vmatprep.subr.mxu0 %v185
    %192 = vmatpush1.msra.mxu0 %v182
    %193 = vmatprep.subr.mxu0 0.0
    %194 = vmatpush1.msra.mxu0 0.0
    %195 = vmatprep.subr.mxu0 0.0
    %196 = vmatpush1.msra.mxu0 0.0
    %197 = vmatprep.subr.mxu0 0.0
    %198 = vmatpush1.msra.mxu0 0.0
    %199 = vmatprep.subr.mxu0 0.0
    %200 = vmatpush1.msra.mxu0 0.0
    %201 = vmatprep.subr.mxu0 0.0
    %202 = vmatpush1.msra.mxu0 0.0
    %203 = vmatprep.subr.mxu0 0.0
    %204 = vmatpush1.msra.mxu0 0.0
    %205 = vmatprep.subr.mxu0 0.0
    %206 = vmatpush1.msra.mxu0 0.0
    %207 = vmatprep.subr.mxu0 0.0
    %208 = vmatpush1.msra.mxu0 0.0
    %209 = vmatprep.subr.mxu0 0.0
    %210 = vmatpush1.msra.mxu0 0.0
    %211 = vmatprep.subr.mxu0 0.0
    %212 = vmatpush1.msra.mxu0 0.0
    %213 = vmatprep.subr.mxu0 0.0
    %214 = vmatpush1.msra.mxu0 0.0
    %215 = vmatprep.subr.mxu0 0.0
    %216 = vmatpush1.msra.mxu0 0.0
    %217 = vmatprep.subr.mxu0 0.0
    %218 = vmatpush1.msra.mxu0 0.0
    %219 = vmatprep.subr.mxu0 0.0
    %220 = vmatpush1.msra.mxu0 0.0
    %221 = vmatprep.subr.mxu0 0.0
    %222 = vmatpush1.msra.mxu0 0.0
    %223 = vmatprep.subr.mxu0 0.0
    %224 = vmatpush1.msra.mxu0 0.0
    %225 = vmatprep.subr.mxu0 0.0
    %226 = vmatpush1.msra.mxu0 0.0
    %227 = vmatprep.subr.mxu0 0.0
    %228 = vmatpush1.msra.mxu0 0.0
    %229 = vmatprep.subr.mxu0 0.0
    %230 = vmatpush1.msra.mxu0 0.0
    %231 = vmatprep.subr.mxu0 0.0
    %232 = vmatpush1.msra.mxu0 0.0
    %233 = vmatprep.subr.mxu0 0.0
    %234 = vmatpush1.msra.mxu0 0.0
    %235 = vmatprep.subr.mxu0 0.0
    %236 = vmatpush1.msra.mxu0 0.0
    %237 = vmatprep.subr.mxu0 0.0
    %238 = vmatpush1.msra.mxu0 0.0
    %239 = vmatprep.subr.mxu0 0.0
    %240 = vmatpush1.msra.mxu0 0.0
    %241 = vmatprep.subr.mxu0 0.0
    %242 = vmatpush1.msra.mxu0 0.0
    %243 = vmatprep.subr.mxu0 0.0
    %244 = vmatpush1.msra.mxu0 0.0
    %245 = vmatprep.subr.mxu0 0.0
    %246 = vmatpush1.msra.mxu0 0.0
    %247 = vmatprep.subr.mxu0 0.0
    %248 = vmatpush1.msra.mxu0 0.0
    %249 = vmatprep.subr.mxu0 0.0
    %250 = vmatpush1.msra.mxu0 0.0
    %251 = vmatprep.mubr.f32.mxu0 0.0
    %252 = vmatmul.mubr.f32.gmra.mrb[0].mxu0 %v170
    %v253 = vpop.f32.mrb[0].mxu0
    %v254 = vadd.f32 %v147, %v253
    %v255 = vpop.f32.mrb[0].mxu0
    %v256 = vadd.f32 %v149, %v255
    %257 = vmatprep.mubr.f32.mxu0 0.0
    %258 = vmatmul.mubr.f32.gmra.mrb[0].mxu0 %v173
    %v259 = vpop.f32.mrb[0].mxu0
    %v260 = vadd.f32 %v153, %v259
    %v261 = vpop.f32.mrb[0].mxu0
    %v262 = vadd.f32 %v155, %v261
    %263 = vmatprep.mubr.f32.mxu0 0.0
    %264 = vmatmul.mubr.f32.gmra.mrb[0].mxu0 %v176
    %v265 = vpop.f32.mrb[0].mxu0
    %v266 = vadd.f32 %v159, %v265
    %v267 = vpop.f32.mrb[0].mxu0
    %v268 = vadd.f32 %v161, %v267
    %269 = vmatprep.mubr.f32.mxu0 0.0
    %270 = vmatmul.mubr.f32.gmra.mrb[0].mxu0 %v179
    %v271 = vpop.f32.mrb[0].mxu0
    %v272 = vadd.f32 %v165, %v271
    %v273 = vpop.f32.mrb[0].mxu0
    %v274 = vadd.f32 %v167, %v273
    %275 = vdwg.mxu0
    %v276 = vld [vmem:[%s0 + $0x2] sm:$0xff]
    %v277 = vld [vmem:[%s0 + $0xa] sm:$0xff]
    %v278 = vld [vmem:[%s0 + $0x1a] sm:$0xff]
    %v279 = vld [vmem:[%s0 + $0x22] sm:$0xff]
    %s280 = scalar_lea.vmem %s1, 96
    %v281 = vld [vmem:[%s280] sm:$0xff]
    %v282 = vld [vmem:[%s280 + $0x8] sm:$0xff]
    %v283 = vld [vmem:[%s280 + $0x10] sm:$0xff]
    %v284 = vld [vmem:[%s280 + $0x18] sm:$0xff]
    %v285 = vld [vmem:[%s280 + $0x20] sm:$0xf]
    %v286 = vld [vmem:[%s280 + $0x28] sm:$0xf]
    %v288 = vsel %vm60, %v276, 0
    %v291 = vsel %vm60, %v277, 0
    %v294 = vsel %vm60, %v278, 0
    %v297 = vsel %vm60, %v279, 0
    %v300 = vsel %vm73, %v285, 0
    %v303 = vsel %vm73, %v286, 0
    %305 = vmatprep.subr.mxu0 %v282
    %306 = vmatpush1.msra.mxu0 %v281
    %307 = vmatprep.subr.mxu0 %v284
    %308 = vmatpush1.msra.mxu0 %v283
    %309 = vmatprep.subr.mxu0 %v303
    %310 = vmatpush1.msra.mxu0 %v300
    %311 = vmatprep.subr.mxu0 0.0
    %312 = vmatpush1.msra.mxu0 0.0
    %313 = vmatprep.subr.mxu0 0.0
    %314 = vmatpush1.msra.mxu0 0.0
    %315 = vmatprep.subr.mxu0 0.0
    %316 = vmatpush1.msra.mxu0 0.0
    %317 = vmatprep.subr.mxu0 0.0
    %318 = vmatpush1.msra.mxu0 0.0
    %319 = vmatprep.subr.mxu0 0.0
    %320 = vmatpush1.msra.mxu0 0.0
    %321 = vmatprep.subr.mxu0 0.0
    %322 = vmatpush1.msra.mxu0 0.0
    %323 = vmatprep.subr.mxu0 0.0
    %324 = vmatpush1.msra.mxu0 0.0
    %325 = vmatprep.subr.mxu0 0.0
    %326 = vmatpush1.msra.mxu0 0.0
    %327 = vmatprep.subr.mxu0 0.0
    %328 = vmatpush1.msra.mxu0 0.0
    %329 = vmatprep.subr.mxu0 0.0
    %330 = vmatpush1.msra.mxu0 0.0
    %331 = vmatprep.subr.mxu0 0.0
    %332 = vmatpush1.msra.mxu0 0.0
    %333 = vmatprep.subr.mxu0 0.0
    %334 = vmatpush1.msra.mxu0 0.0
    %335 = vmatprep.subr.mxu0 0.0
    %336 = vmatpush1.msra.mxu0 0.0
    %337 = vmatprep.subr.mxu0 0.0
    %338 = vmatpush1.msra.mxu0 0.0
    %339 = vmatprep.subr.mxu0 0.0
    %340 = vmatpush1.msra.mxu0 0.0
    %341 = vmatprep.subr.mxu0 0.0
    %342 = vmatpush1.msra.mxu0 0.0
    %343 = vmatprep.subr.mxu0 0.0
    %344 = vmatpush1.msra.mxu0 0.0
    %345 = vmatprep.subr.mxu0 0.0
    %346 = vmatpush1.msra.mxu0 0.0
    %347 = vmatprep.subr.mxu0 0.0
    %348 = vmatpush1.msra.mxu0 0.0
    %349 = vmatprep.subr.mxu0 0.0
    %350 = vmatpush1.msra.mxu0 0.0
    %351 = vmatprep.subr.mxu0 0.0
    %352 = vmatpush1.msra.mxu0 0.0
    %353 = vmatprep.subr.mxu0 0.0
    %354 = vmatpush1.msra.mxu0 0.0
    %355 = vmatprep.subr.mxu0 0.0
    %356 = vmatpush1.msra.mxu0 0.0
    %357 = vmatprep.subr.mxu0 0.0
    %358 = vmatpush1.msra.mxu0 0.0
    %359 = vmatprep.subr.mxu0 0.0
    %360 = vmatpush1.msra.mxu0 0.0
    %361 = vmatprep.subr.mxu0 0.0
    %362 = vmatpush1.msra.mxu0 0.0
    %363 = vmatprep.subr.mxu0 0.0
    %364 = vmatpush1.msra.mxu0 0.0
    %365 = vmatprep.subr.mxu0 0.0
    %366 = vmatpush1.msra.mxu0 0.0
    %367 = vmatprep.subr.mxu0 0.0
    %368 = vmatpush1.msra.mxu0 0.0
    %369 = vmatprep.mubr.f32.mxu0 0.0
    %370 = vmatmul.mubr.f32.gmra.mrb[0].mxu0 %v288
    %v371 = vpop.f32.mrb[0].mxu0
    %v372 = vadd.f32 0.0, %v371
    %v373 = vpop.f32.mrb[0].mxu0
    %v374 = vadd.f32 0.0, %v373
    %375 = vmatprep.mubr.f32.mxu0 0.0
    %376 = vmatmul.mubr.f32.gmra.mrb[0].mxu0 %v291
    %v377 = vpop.f32.mrb[0].mxu0
    %v378 = vadd.f32 0.0, %v377
    %v379 = vpop.f32.mrb[0].mxu0
    %v380 = vadd.f32 0.0, %v379
    %381 = vmatprep.mubr.f32.mxu0 0.0
    %382 = vmatmul.mubr.f32.gmra.mrb[0].mxu0 %v294
    %v383 = vpop.f32.mrb[0].mxu0
    %v384 = vadd.f32 0.0, %v383
    %v385 = vpop.f32.mrb[0].mxu0
    %v386 = vadd.f32 0.0, %v385
    %387 = vmatprep.mubr.f32.mxu0 0.0
    %388 = vmatmul.mubr.f32.gmra.mrb[0].mxu0 %v297
    %v389 = vpop.f32.mrb[0].mxu0
    %v390 = vadd.f32 0.0, %v389
    %v391 = vpop.f32.mrb[0].mxu0
    %v392 = vadd.f32 0.0, %v391
    %393 = vdwg.mxu0
    %v394 = vadd.f32 %v254, %v372
    %v395 = vadd.f32 %v256, %v374
    %v396 = vadd.f32 %v260, %v378
    %v397 = vadd.f32 %v262, %v380
    %v398 = vadd.f32 %v266, %v384
    %v399 = vadd.f32 %v268, %v386
    %v400 = vadd.f32 %v272, %v390
    %v401 = vadd.f32 %v274, %v392
    %v402 = vmax.f32 %v394, %v395
    %v403 = vmax.f32 %v396, %v397
    %v404 = vmax.f32 %v398, %v399
    %v405 = vmax.f32 %v400, %v401
    %406 = vst [vmem:[#allocation2] sm:$0xff] %v402
    %407 = vst [vmem:[#allocation2 + $0x8] sm:$0xff] %v403
    %408 = vst [vmem:[#allocation2 + $0x10] sm:$0xff] %v404
    %409 = vst [vmem:[#allocation2 + $0x18] sm:$0xff] %v405
    %v410 = vld [vmem:[#allocation2] ss:$2 sm:$0xff]
    %s411 = scalar_lea.vmem [#allocation2], 16
    %v412 = vld [vmem:[%s411] ss:$2 sm:$0xff]
    %s413 = scalar_lea.vmem [#allocation2], 1
    %v414 = vld [vmem:[%s413] ss:$2 sm:$0xff]
    %s415 = scalar_lea.vmem [#allocation2], 17
    %v416 = vld [vmem:[%s415] ss:$2 sm:$0xff]
    %v417 = vmax.f32 %v410, %v414
    %v418 = vmax.f32 %v412, %v416
    %v419 = vld [vmem:[%s2] sm:$0x1]
    %v421 = vlaneseq
    %v422 = vshrl.u32 %v421, 7
    %v423 = vsub.s32 0, %v422
    %v424 = vrot.slane %v419, %v423
    %v426 = vadd.f32 %v417, %v424
    %v427 = vadd.f32 %v418, %v424
    %v428 = vmax.f32 %v426, 0.0
    %v429 = vmax.f32 %v427, 0.0
    %v430 = vlaneseq
    %vm431 = vcmp.ge.s32.totalorder %v430, 0
    %vm432 = vcmp.lt.s32.totalorder %v430, 192
    %vm433 = vmand %vm431, %vm432
    %434 = vst.msk [vmem:[#allocation3] ss:$8 sm:$0x3] %vm433, 0.0
    %435 = vst.msk [vmem:[#allocation3] ss:$8 sm:$0x0] %vm433, 0.0
    %s436 = scalar_lea.vmem [#allocation3], 32
    %437 = vst.msk [vmem:[%s436] ss:$8 sm:$0x3] %vm433, 0.0
    %438 = vst.msk [vmem:[%s436] ss:$8 sm:$0x0] %vm433, 0.0
    %s439 = scalar_lea.vmem [#allocation3], 17
    %440 = vst.msk [vmem:[%s439] ss:$8 sm:$0x3] %vm433, 0.0
    %441 = vst.msk [vmem:[%s439] ss:$8 sm:$0x0] %vm433, 0.0
    %s442 = scalar_lea.vmem [#allocation3], 49
    %443 = vst.msk [vmem:[%s442] ss:$8 sm:$0x3] %vm433, 0.0
    %444 = vst.msk [vmem:[%s442] ss:$8 sm:$0x0] %vm433, 0.0
    %vm445 = vcmask 261121
    %446 = vst.msk [vmem:[#allocation3] sm:$0xfe] %vm445, 0.0
    %vm447 = vcmask 253952
    %448 = vst.msk [vmem:[#allocation3 + $0x10] sm:$0x1] %vm447, 0.0
    %449 = vst.msk [vmem:[#allocation3 + $0x20] sm:$0xfe] %vm445, 0.0
    %450 = vst.msk [vmem:[#allocation3 + $0x30] sm:$0x1] %vm447, 0.0
    %vm451 = vcmask 523521
    %452 = vst.msk [vmem:[#allocation3 + $0x8] sm:$0xfe] %vm451, 0.0
    %vm453 = vcmask 516352
    %454 = vst.msk [vmem:[#allocation3 + $0x18] sm:$0x1] %vm453, 0.0
    %455 = vst.msk [vmem:[#allocation3 + $0x28] sm:$0xfe] %vm451, 0.0
    %456 = vst.msk [vmem:[#allocation3 + $0x38] sm:$0x1] %vm453, 0.0
    %v459 = vrot.slane %v428, 7
    %v460 = vrot.slane %v429, 7
    %461 = vrot.lane.b32.xlu0 %v459, 32
    %v462 = vpop.permute.xlu0 %461
    %463 = vrot.lane.b32.xlu0 %v460, 32
    %v464 = vpop.permute.xlu0 %463
    %vm467 = vcmask 1047809
    %468 = vst.msk [vmem:[#allocation3] sm:$0xfe] %vm467, %v462
    %469 = vst.msk [vmem:[#allocation3 + $0x8] sm:$0xfe] %vm445, %v462
    %vm470 = vcmask 1040640
    %471 = vst.msk [vmem:[#allocation3 + $0x10] sm:$0x1] %vm470, %v462
    %472 = vst.msk [vmem:[#allocation3 + $0x18] sm:$0x1] %vm447, %v462
    %473 = vst.msk [vmem:[#allocation3 + $0x20] sm:$0xfe] %vm467, %v464
    %474 = vst.msk [vmem:[#allocation3 + $0x28] sm:$0xfe] %vm445, %v464
    %475 = vst.msk [vmem:[#allocation3 + $0x30] sm:$0x1] %vm470, %v464
    %476 = vst.msk [vmem:[#allocation3 + $0x38] sm:$0x1] %vm447, %v464
    %v477 = vld [vmem:[#allocation3] sm:$0xff]
    %v478 = vld [vmem:[#allocation3 + $0x8] sm:$0xff]
    %v479 = vld [vmem:[#allocation3 + $0x20] sm:$0xff]
    %v480 = vld [vmem:[#allocation3 + $0x28] sm:$0xff]
    %v481 = vld [vmem:[%s3] sm:$0xff]
    %v482 = vld [vmem:[%s3 + $0x8] sm:$0xff]
    %v483 = vld [vmem:[%s3 + $0x10] sm:$0xff]
    %v484 = vld [vmem:[%s3 + $0x18] sm:$0xff]
    %v485 = vld [vmem:[%s3 + $0x20] sm:$0xff]
    %v486 = vld [vmem:[%s3 + $0x28] sm:$0xff]
    %v487 = vld [vmem:[%s3 + $0x30] sm:$0xff]
    %v488 = vld [vmem:[%s3 + $0x38] sm:$0xff]
    %v489 = vld [vmem:[%s3 + $0x40] sm:$0xff]
    %v490 = vld [vmem:[%s3 + $0x48] sm:$0xff]
    %v491 = vld [vmem:[%s3 + $0x50] sm:$0xff]
    %v492 = vld [vmem:[%s3 + $0x58] sm:$0xff]
    %v493 = vld [vmem:[%s3 + $0x60] sm:$0xff]
    %v494 = vld [vmem:[%s3 + $0x68] sm:$0xff]
    %v495 = vld [vmem:[%s3 + $0x70] sm:$0xff]
    %v496 = vld [vmem:[%s3 + $0x78] sm:$0xff]
    %v497 = vld [vmem:[%s3 + $0x80] sm:$0xff]
    %v498 = vld [vmem:[%s3 + $0x88] sm:$0xff]
    %v499 = vld [vmem:[%s3 + $0x90] sm:$0xff]
    %v500 = vld [vmem:[%s3 + $0x98] sm:$0xff]
    %v501 = vld [vmem:[%s3 + $0xa0] sm:$0xff]
    %v502 = vld [vmem:[%s3 + $0xa8] sm:$0xff]
    %v503 = vld [vmem:[%s3 + $0xb0] sm:$0xff]
    %v504 = vld [vmem:[%s3 + $0xb8] sm:$0xff]
    %v505 = vld [vmem:[%s3 + $0xc0] sm:$0xff]
    %v506 = vld [vmem:[%s3 + $0xc8] sm:$0xff]
    %v507 = vld [vmem:[%s3 + $0xd0] sm:$0xff]
    %v508 = vld [vmem:[%s3 + $0xd8] sm:$0xff]
    %v509 = vld [vmem:[%s3 + $0xe0] sm:$0xff]
    %v510 = vld [vmem:[%s3 + $0xe8] sm:$0xff]
    %v511 = vld [vmem:[%s3 + $0xf0] sm:$0xff]
    %v512 = vld [vmem:[%s3 + $0xf8] sm:$0xff]
    %v513 = vld [vmem:[%s3 + $0x100] sm:$0xff]
    %v514 = vld [vmem:[%s3 + $0x108] sm:$0xff]
    %v515 = vld [vmem:[%s3 + $0x110] sm:$0xff]
    %v516 = vld [vmem:[%s3 + $0x118] sm:$0xff]
    %v517 = vld [vmem:[%s3 + $0x120] sm:$0xff]
    %v518 = vld [vmem:[%s3 + $0x128] sm:$0xff]
    %v519 = vld [vmem:[%s3 + $0x130] sm:$0xff]
    %v520 = vld [vmem:[%s3 + $0x138] sm:$0xff]
    %v521 = vld [vmem:[%s3 + $0x140] sm:$0xff]
    %v522 = vld [vmem:[%s3 + $0x148] sm:$0xff]
    %v523 = vld [vmem:[%s3 + $0x150] sm:$0xff]
    %v524 = vld [vmem:[%s3 + $0x158] sm:$0xff]
    %v525 = vld [vmem:[%s3 + $0x160] sm:$0xff]
    %v526 = vld [vmem:[%s3 + $0x168] sm:$0xff]
    %v527 = vld [vmem:[%s3 + $0x170] sm:$0xff]
    %v528 = vld [vmem:[%s3 + $0x178] sm:$0xff]
    %v529 = vld [vmem:[#allocation3] sm:$0xfe]
    %v530 = vld [vmem:[#allocation3 + $0x8] sm:$0xfe]
    %v531 = vld [vmem:[#allocation3 + $0x10] sm:$0x1]
    %v532 = vld [vmem:[#allocation3 + $0x18] sm:$0x1]
    %v533 = vld [vmem:[#allocation3 + $0x20] sm:$0xfe]
    %v534 = vld [vmem:[#allocation3 + $0x28] sm:$0xfe]
    %v535 = vld [vmem:[#allocation3 + $0x30] sm:$0x1]
    %v536 = vld [vmem:[#allocation3 + $0x38] sm:$0x1]
    %vm545 = vcmask 1046528
    %v546 = vrot.slane %v529, 1
    %v547 = vrot.slane %v531, 1
    %v548 = vsel %vm545, %v546, %v547
    %v549 = vrot.slane %v530, 1
    %v550 = vrot.slane %v532, 1
    %v551 = vsel %vm545, %v549, %v550
    %v552 = vrot.slane %v533, 1
    %v553 = vrot.slane %v535, 1
    %v554 = vsel %vm545, %v552, %v553
    %v555 = vrot.slane %v534, 1
    %v556 = vrot.slane %v536, 1
    %v557 = vsel %vm545, %v555, %v556
    %s560 = scalar_lea.vmem %s3, 384
    %v561 = vld [vmem:[%s560] sm:$0xff]
    %v562 = vld [vmem:[%s560 + $0x8] sm:$0xff]
    %v563 = vld [vmem:[%s560 + $0x10] sm:$0xff]
    %v564 = vld [vmem:[%s560 + $0x18] sm:$0xff]
    %v565 = vld [vmem:[%s560 + $0x20] sm:$0xff]
    %v566 = vld [vmem:[%s560 + $0x28] sm:$0xff]
    %v567 = vld [vmem:[%s560 + $0x30] sm:$0xff]
    %v568 = vld [vmem:[%s560 + $0x38] sm:$0xff]
    %v569 = vld [vmem:[%s560 + $0x40] sm:$0xff]
    %v570 = vld [vmem:[%s560 + $0x48] sm:$0xff]
    %v571 = vld [vmem:[%s560 + $0x50] sm:$0xff]
    %v572 = vld [vmem:[%s560 + $0x58] sm:$0xff]
    %v573 = vld [vmem:[%s560 + $0x60] sm:$0xff]
    %v574 = vld [vmem:[%s560 + $0x68] sm:$0xff]
    %v575 = vld [vmem:[%s560 + $0x70] sm:$0xff]
    %v576 = vld [vmem:[%s560 + $0x78] sm:$0xff]
    %v577 = vld [vmem:[%s560 + $0x80] sm:$0xff]
    %v578 = vld [vmem:[%s560 + $0x88] sm:$0xff]
    %v579 = vld [vmem:[%s560 + $0x90] sm:$0xff]
    %v580 = vld [vmem:[%s560 + $0x98] sm:$0xff]
    %v581 = vld [vmem:[%s560 + $0xa0] sm:$0xff]
    %v582 = vld [vmem:[%s560 + $0xa8] sm:$0xff]
    %v583 = vld [vmem:[%s560 + $0xb0] sm:$0xff]
    %v584 = vld [vmem:[%s560 + $0xb8] sm:$0xff]
    %v585 = vld [vmem:[%s560 + $0xc0] sm:$0xff]
    %v586 = vld [vmem:[%s560 + $0xc8] sm:$0xff]
    %v587 = vld [vmem:[%s560 + $0xd0] sm:$0xff]
    %v588 = vld [vmem:[%s560 + $0xd8] sm:$0xff]
    %v589 = vld [vmem:[%s560 + $0xe0] sm:$0xff]
    %v590 = vld [vmem:[%s560 + $0xe8] sm:$0xff]
    %v591 = vld [vmem:[%s560 + $0xf0] sm:$0xff]
    %v592 = vld [vmem:[%s560 + $0xf8] sm:$0xff]
    %v593 = vld [vmem:[%s560 + $0x100] sm:$0xff]
    %v594 = vld [vmem:[%s560 + $0x108] sm:$0xff]
    %v595 = vld [vmem:[%s560 + $0x110] sm:$0xff]
    %v596 = vld [vmem:[%s560 + $0x118] sm:$0xff]
    %v597 = vld [vmem:[%s560 + $0x120] sm:$0xff]
    %v598 = vld [vmem:[%s560 + $0x128] sm:$0xff]
    %v599 = vld [vmem:[%s560 + $0x130] sm:$0xff]
    %v600 = vld [vmem:[%s560 + $0x138] sm:$0xff]
    %v601 = vld [vmem:[%s560 + $0x140] sm:$0xff]
    %v602 = vld [vmem:[%s560 + $0x148] sm:$0xff]
    %v603 = vld [vmem:[%s560 + $0x150] sm:$0xff]
    %v604 = vld [vmem:[%s560 + $0x158] sm:$0xff]
    %v605 = vld [vmem:[%s560 + $0x160] sm:$0xff]
    %v606 = vld [vmem:[%s560 + $0x168] sm:$0xff]
    %v607 = vld [vmem:[%s560 + $0x170] sm:$0xff]
    %v608 = vld [vmem:[%s560 + $0x178] sm:$0xff]
    %vm609 = vcmask 523264
    %v610 = vsel %vm609, %v551, 0
    %v612 = vsel %vm609, %v557, 0
    %614 = vmatprep.subr.mxu0 %v562
    %615 = vmatpush1.msra.mxu0 %v561
    %616 = vmatprep.subr.mxu0 %v564
    %617 = vmatpush1.msra.mxu0 %v563
    %618 = vmatprep.subr.mxu0 %v566
    %619 = vmatpush1.msra.mxu0 %v565
    %620 = vmatprep.subr.mxu0 %v568
    %621 = vmatpush1.msra.mxu0 %v567
    %622 = vmatprep.subr.mxu0 %v570
    %623 = vmatpush1.msra.mxu0 %v569
    %624 = vmatprep.subr.mxu0 %v572
    %625 = vmatpush1.msra.mxu0 %v571
    %626 = vmatprep.subr.mxu0 %v574
    %627 = vmatpush1.msra.mxu0 %v573
    %628 = vmatprep.subr.mxu0 %v576
    %629 = vmatpush1.msra.mxu0 %v575
    %630 = vmatprep.subr.mxu0 %v578
    %631 = vmatpush1.msra.mxu0 %v577
    %632 = vmatprep.subr.mxu0 %v580
    %633 = vmatpush1.msra.mxu0 %v579
    %634 = vmatprep.subr.mxu0 %v582
    %635 = vmatpush1.msra.mxu0 %v581
    %636 = vmatprep.subr.mxu0 %v584
    %637 = vmatpush1.msra.mxu0 %v583
    %638 = vmatprep.subr.mxu0 %v586
    %639 = vmatpush1.msra.mxu0 %v585
    %640 = vmatprep.subr.mxu0 %v588
    %641 = vmatpush1.msra.mxu0 %v587
    %642 = vmatprep.subr.mxu0 %v590
    %643 = vmatpush1.msra.mxu0 %v589
    %644 = vmatprep.subr.mxu0 %v592
    %645 = vmatpush1.msra.mxu0 %v591
    %646 = vmatprep.subr.mxu0 %v594
    %647 = vmatpush1.msra.mxu0 %v593
    %648 = vmatprep.subr.mxu0 %v596
    %649 = vmatpush1.msra.mxu0 %v595
    %650 = vmatprep.subr.mxu0 %v598
    %651 = vmatpush1.msra.mxu0 %v597
    %652 = vmatprep.subr.mxu0 %v600
    %653 = vmatpush1.msra.mxu0 %v599
    %654 = vmatprep.subr.mxu0 %v602
    %655 = vmatpush1.msra.mxu0 %v601
    %656 = vmatprep.subr.mxu0 %v604
    %657 = vmatpush1.msra.mxu0 %v603
    %658 = vmatprep.subr.mxu0 %v606
    %659 = vmatpush1.msra.mxu0 %v605
    %660 = vmatprep.subr.mxu0 %v608
    %661 = vmatpush1.msra.mxu0 %v607
    %662 = vmatprep.subr.mxu0 0.0
    %663 = vmatpush1.msra.mxu0 0.0
    %664 = vmatprep.subr.mxu0 0.0
    %665 = vmatpush1.msra.mxu0 0.0
    %666 = vmatprep.subr.mxu0 0.0
    %667 = vmatpush1.msra.mxu0 0.0
    %668 = vmatprep.subr.mxu0 0.0
    %669 = vmatpush1.msra.mxu0 0.0
    %670 = vmatprep.subr.mxu0 0.0
    %671 = vmatpush1.msra.mxu0 0.0
    %672 = vmatprep.subr.mxu0 0.0
    %673 = vmatpush1.msra.mxu0 0.0
    %674 = vmatprep.subr.mxu0 0.0
    %675 = vmatpush1.msra.mxu0 0.0
    %676 = vmatprep.subr.mxu0 0.0
    %677 = vmatpush1.msra.mxu0 0.0
    %678 = vmatprep.mubr.f32.mxu0 %v610
    %679 = vmatmul.mubr.f32.gmra.mrb[0].mxu0 %v548
    %v680 = vpop.f32.mrb[0].mxu0
    %v681 = vadd.f32 0.0, %v680
    %v682 = vpop.f32.mrb[0].mxu0
    %v683 = vadd.f32 0.0, %v682
    %684 = vmatprep.mubr.f32.mxu0 %v612
    %685 = vmatmul.mubr.f32.gmra.mrb[0].mxu0 %v554
    %v686 = vpop.f32.mrb[0].mxu0
    %v687 = vadd.f32 0.0, %v686
    %v688 = vpop.f32.mrb[0].mxu0
    %v689 = vadd.f32 0.0, %v688
    %690 = vdwg.mxu0
    %v692 = vsel %vm609, %v478, 0
    %v695 = vsel %vm609, %v480, 0
    %697 = vmatprep.subr.mxu0 %v482
    %698 = vmatpush1.msra.mxu0 %v481
    %699 = vmatprep.subr.mxu0 %v484
    %700 = vmatpush1.msra.mxu0 %v483
    %701 = vmatprep.subr.mxu0 %v486
    %702 = vmatpush1.msra.mxu0 %v485
    %703 = vmatprep.subr.mxu0 %v488
    %704 = vmatpush1.msra.mxu0 %v487
    %705 = vmatprep.subr.mxu0 %v490
    %706 = vmatpush1.msra.mxu0 %v489
    %707 = vmatprep.subr.mxu0 %v492
    %708 = vmatpush1.msra.mxu0 %v491
    %709 = vmatprep.subr.mxu0 %v494
    %710 = vmatpush1.msra.mxu0 %v493
    %711 = vmatprep.subr.mxu0 %v496
    %712 = vmatpush1.msra.mxu0 %v495
    %713 = vmatprep.subr.mxu0 %v498
    %714 = vmatpush1.msra.mxu0 %v497
    %715 = vmatprep.subr.mxu0 %v500
    %716 = vmatpush1.msra.mxu0 %v499
    %717 = vmatprep.subr.mxu0 %v502
    %718 = vmatpush1.msra.mxu0 %v501
    %719 = vmatprep.subr.mxu0 %v504
    %720 = vmatpush1.msra.mxu0 %v503
    %721 = vmatprep.subr.mxu0 %v506
    %722 = vmatpush1.msra.mxu0 %v505
    %723 = vmatprep.subr.mxu0 %v508
    %724 = vmatpush1.msra.mxu0 %v507
    %725 = vmatprep.subr.mxu0 %v510
    %726 = vmatpush1.msra.mxu0 %v509
    %727 = vmatprep.subr.mxu0 %v512
    %728 = vmatpush1.msra.mxu0 %v511
    %729 = vmatprep.subr.mxu0 %v514
    %730 = vmatpush1.msra.mxu0 %v513
    %731 = vmatprep.subr.mxu0 %v516
    %732 = vmatpush1.msra.mxu0 %v515
    %733 = vmatprep.subr.mxu0 %v518
    %734 = vmatpush1.msra.mxu0 %v517
    %735 = vmatprep.subr.mxu0 %v520
    %736 = vmatpush1.msra.mxu0 %v519
    %737 = vmatprep.subr.mxu0 %v522
    %738 = vmatpush1.msra.mxu0 %v521
    %739 = vmatprep.subr.mxu0 %v524
    %740 = vmatpush1.msra.mxu0 %v523
    %741 = vmatprep.subr.mxu0 %v526
    %742 = vmatpush1.msra.mxu0 %v525
    %743 = vmatprep.subr.mxu0 %v528
    %744 = vmatpush1.msra.mxu0 %v527
    %745 = vmatprep.subr.mxu0 0.0
    %746 = vmatpush1.msra.mxu0 0.0
    %747 = vmatprep.subr.mxu0 0.0
    %748 = vmatpush1.msra.mxu0 0.0
    %749 = vmatprep.subr.mxu0 0.0
    %750 = vmatpush1.msra.mxu0 0.0
    %751 = vmatprep.subr.mxu0 0.0
    %752 = vmatpush1.msra.mxu0 0.0
    %753 = vmatprep.subr.mxu0 0.0
    %754 = vmatpush1.msra.mxu0 0.0
    %755 = vmatprep.subr.mxu0 0.0
    %756 = vmatpush1.msra.mxu0 0.0
    %757 = vmatprep.subr.mxu0 0.0
    %758 = vmatpush1.msra.mxu0 0.0
    %759 = vmatprep.subr.mxu0 0.0
    %760 = vmatpush1.msra.mxu0 0.0
    %761 = vmatprep.mubr.f32.mxu0 %v692
    %762 = vmatmul.mubr.f32.gmra.mrb[0].mxu0 %v477
    %v763 = vpop.f32.mrb[0].mxu0
    %v764 = vadd.f32 %v681, %v763
    %v765 = vpop.f32.mrb[0].mxu0
    %v766 = vadd.f32 %v683, %v765
    %767 = vmatprep.mubr.f32.mxu0 %v695
    %768 = vmatmul.mubr.f32.gmra.mrb[0].mxu0 %v479
    %v769 = vpop.f32.mrb[0].mxu0
    %v770 = vadd.f32 %v687, %v769
    %v771 = vpop.f32.mrb[0].mxu0
    %v772 = vadd.f32 %v689, %v771
    %773 = vdwg.mxu0
    %v774 = vld [vmem:[#allocation3] sm:$0xfc]
    %v775 = vld [vmem:[#allocation3 + $0x8] sm:$0xfc]
    %v776 = vld [vmem:[#allocation3 + $0x10] sm:$0x3]
    %v777 = vld [vmem:[#allocation3 + $0x18] sm:$0x3]
    %v778 = vld [vmem:[#allocation3 + $0x20] sm:$0xfc]
    %v779 = vld [vmem:[#allocation3 + $0x28] sm:$0xfc]
    %v780 = vld [vmem:[#allocation3 + $0x30] sm:$0x3]
    %v781 = vld [vmem:[#allocation3 + $0x38] sm:$0x3]
    %vm790 = vcmask 1045504
    %v791 = vrot.slane %v774, 2
    %v792 = vrot.slane %v776, 2
    %v793 = vsel %vm790, %v791, %v792
    %v794 = vrot.slane %v775, 2
    %v795 = vrot.slane %v777, 2
    %v796 = vsel %vm790, %v794, %v795
    %v797 = vrot.slane %v778, 2
    %v798 = vrot.slane %v780, 2
    %v799 = vsel %vm790, %v797, %v798
    %v800 = vrot.slane %v779, 2
    %v801 = vrot.slane %v781, 2
    %v802 = vsel %vm790, %v800, %v801
    %s805 = scalar_lea.vmem %s3, 768
    %v806 = vld [vmem:[%s805] sm:$0xff]
    %v807 = vld [vmem:[%s805 + $0x8] sm:$0xff]
    %v808 = vld [vmem:[%s805 + $0x10] sm:$0xff]
    %v809 = vld [vmem:[%s805 + $0x18] sm:$0xff]
    %v810 = vld [vmem:[%s805 + $0x20] sm:$0xff]
    %v811 = vld [vmem:[%s805 + $0x28] sm:$0xff]
    %v812 = vld [vmem:[%s805 + $0x30] sm:$0xff]
    %v813 = vld [vmem:[%s805 + $0x38] sm:$0xff]
    %v814 = vld [vmem:[%s805 + $0x40] sm:$0xff]
    %v815 = vld [vmem:[%s805 + $0x48] sm:$0xff]
    %v816 = vld [vmem:[%s805 + $0x50] sm:$0xff]
    %v817 = vld [vmem:[%s805 + $0x58] sm:$0xff]
    %v818 = vld [vmem:[%s805 + $0x60] sm:$0xff]
    %v819 = vld [vmem:[%s805 + $0x68] sm:$0xff]
    %v820 = vld [vmem:[%s805 + $0x70] sm:$0xff]
    %v821 = vld [vmem:[%s805 + $0x78] sm:$0xff]
    %v822 = vld [vmem:[%s805 + $0x80] sm:$0xff]
    %v823 = vld [vmem:[%s805 + $0x88] sm:$0xff]
    %v824 = vld [vmem:[%s805 + $0x90] sm:$0xff]
    %v825 = vld [vmem:[%s805 + $0x98] sm:$0xff]
    %v826 = vld [vmem:[%s805 + $0xa0] sm:$0xff]
    %v827 = vld [vmem:[%s805 + $0xa8] sm:$0xff]
    %v828 = vld [vmem:[%s805 + $0xb0] sm:$0xff]
    %v829 = vld [vmem:[%s805 + $0xb8] sm:$0xff]
    %v830 = vld [vmem:[%s805 + $0xc0] sm:$0xff]
    %v831 = vld [vmem:[%s805 + $0xc8] sm:$0xff]
    %v832 = vld [vmem:[%s805 + $0xd0] sm:$0xff]
    %v833 = vld [vmem:[%s805 + $0xd8] sm:$0xff]
    %v834 = vld [vmem:[%s805 + $0xe0] sm:$0xff]
    %v835 = vld [vmem:[%s805 + $0xe8] sm:$0xff]
    %v836 = vld [vmem:[%s805 + $0xf0] sm:$0xff]
    %v837 = vld [vmem:[%s805 + $0xf8] sm:$0xff]
    %v838 = vld [vmem:[%s805 + $0x100] sm:$0xff]
    %v839 = vld [vmem:[%s805 + $0x108] sm:$0xff]
    %v840 = vld [vmem:[%s805 + $0x110] sm:$0xff]
    %v841 = vld [vmem:[%s805 + $0x118] sm:$0xff]
    %v842 = vld [vmem:[%s805 + $0x120] sm:$0xff]
    %v843 = vld [vmem:[%s805 + $0x128] sm:$0xff]
    %v844 = vld [vmem:[%s805 + $0x130] sm:$0xff]
    %v845 = vld [vmem:[%s805 + $0x138] sm:$0xff]
    %v846 = vld [vmem:[%s805 + $0x140] sm:$0xff]
    %v847 = vld [vmem:[%s805 + $0x148] sm:$0xff]
    %v848 = vld [vmem:[%s805 + $0x150] sm:$0xff]
    %v849 = vld [vmem:[%s805 + $0x158] sm:$0xff]
    %v850 = vld [vmem:[%s805 + $0x160] sm:$0xff]
    %v851 = vld [vmem:[%s805 + $0x168] sm:$0xff]
    %v852 = vld [vmem:[%s805 + $0x170] sm:$0xff]
    %v853 = vld [vmem:[%s805 + $0x178] sm:$0xff]
    %v854 = vsel %vm609, %v796, 0
    %v856 = vsel %vm609, %v802, 0
    %858 = vmatprep.subr.mxu0 %v807
    %859 = vmatpush1.msra.mxu0 %v806
    %860 = vmatprep.subr.mxu0 %v809
    %861 = vmatpush1.msra.mxu0 %v808
    %862 = vmatprep.subr.mxu0 %v811
    %863 = vmatpush1.msra.mxu0 %v810
    %864 = vmatprep.subr.mxu0 %v813
    %865 = vmatpush1.msra.mxu0 %v812
    %866 = vmatprep.subr.mxu0 %v815
    %867 = vmatpush1.msra.mxu0 %v814
    %868 = vmatprep.subr.mxu0 %v817
    %869 = vmatpush1.msra.mxu0 %v816
    %870 = vmatprep.subr.mxu0 %v819
    %871 = vmatpush1.msra.mxu0 %v818
    %872 = vmatprep.subr.mxu0 %v821
    %873 = vmatpush1.msra.mxu0 %v820
    %874 = vmatprep.subr.mxu0 %v823
    %875 = vmatpush1.msra.mxu0 %v822
    %876 = vmatprep.subr.mxu0 %v825
    %877 = vmatpush1.msra.mxu0 %v824
    %878 = vmatprep.subr.mxu0 %v827
    %879 = vmatpush1.msra.mxu0 %v826
    %880 = vmatprep.subr.mxu0 %v829
    %881 = vmatpush1.msra.mxu0 %v828
    %882 = vmatprep.subr.mxu0 %v831
    %883 = vmatpush1.msra.mxu0 %v830
    %884 = vmatprep.subr.mxu0 %v833
    %885 = vmatpush1.msra.mxu0 %v832
    %886 = vmatprep.subr.mxu0 %v835
    %887 = vmatpush1.msra.mxu0 %v834
    %888 = vmatprep.subr.mxu0 %v837
    %889 = vmatpush1.msra.mxu0 %v836
    %890 = vmatprep.subr.mxu0 %v839
    %891 = vmatpush1.msra.mxu0 %v838
    %892 = vmatprep.subr.mxu0 %v841
    %893 = vmatpush1.msra.mxu0 %v840
    %894 = vmatprep.subr.mxu0 %v843
    %895 = vmatpush1.msra.mxu0 %v842
    %896 = vmatprep.subr.mxu0 %v845
    %897 = vmatpush1.msra.mxu0 %v844
    %898 = vmatprep.subr.mxu0 %v847
    %899 = vmatpush1.msra.mxu0 %v846
    %900 = vmatprep.subr.mxu0 %v849
    %901 = vmatpush1.msra.mxu0 %v848
    %902 = vmatprep.subr.mxu0 %v851
    %903 = vmatpush1.msra.mxu0 %v850
    %904 = vmatprep.subr.mxu0 %v853
    %905 = vmatpush1.msra.mxu0 %v852
    %906 = vmatprep.subr.mxu0 0.0
    %907 = vmatpush1.msra.mxu0 0.0
    %908 = vmatprep.subr.mxu0 0.0
    %909 = vmatpush1.msra.mxu0 0.0
    %910 = vmatprep.subr.mxu0 0.0
    %911 = vmatpush1.msra.mxu0 0.0
    %912 = vmatprep.subr.mxu0 0.0
    %913 = vmatpush1.msra.mxu0 0.0
    %914 = vmatprep.subr.mxu0 0.0
    %915 = vmatpush1.msra.mxu0 0.0
    %916 = vmatprep.subr.mxu0 0.0
    %917 = vmatpush1.msra.mxu0 0.0
    %918 = vmatprep.subr.mxu0 0.0
    %919 = vmatpush1.msra.mxu0 0.0
    %920 = vmatprep.subr.mxu0 0.0
    %921 = vmatpush1.msra.mxu0 0.0
    %922 = vmatprep.mubr.f32.mxu0 %v854
    %923 = vmatmul.mubr.f32.gmra.mrb[0].mxu0 %v793
    %v924 = vpop.f32.mrb[0].mxu0
    %v925 = vadd.f32 0.0, %v924
    %v926 = vpop.f32.mrb[0].mxu0
    %v927 = vadd.f32 0.0, %v926
    %928 = vmatprep.mubr.f32.mxu0 %v856
    %929 = vmatmul.mubr.f32.gmra.mrb[0].mxu0 %v799
    %v930 = vpop.f32.mrb[0].mxu0
    %v931 = vadd.f32 0.0, %v930
    %v932 = vpop.f32.mrb[0].mxu0
    %v933 = vadd.f32 0.0, %v932
    %934 = vdwg.mxu0
    %v935 = vadd.f32 %v764, %v925
    %v936 = vadd.f32 %v766, %v927
    %v937 = vadd.f32 %v770, %v931
    %v938 = vadd.f32 %v772, %v933
    %v939 = vmax.f32 %v935, %v936
    %v940 = vmax.f32 %v937, %v938
    %941 = vst [vmem:[#allocation4] sm:$0xff] %v939
    %942 = vst [vmem:[#allocation4 + $0x8] sm:$0xff] %v940
    %v943 = vld [vmem:[#allocation4] ss:$2 sm:$0xff]
    %s944 = scalar_lea.vmem [#allocation4], 1
    %v945 = vld [vmem:[%s944] ss:$2 sm:$0xff]
    %v946 = vmax.f32 %v943, %v945
    %v947 = vld [vmem:[%s4] sm:$0x1]
    %v949 = vlaneseq
    %v950 = vshrl.u32 %v949, 7
    %v951 = vsub.s32 0, %v950
    %v952 = vrot.slane %v947, %v951
    %v954 = vadd.f32 %v946, %v952
    %v955 = vmax.f32 %v954, 0.0
    %956 = vst.msk [vmem:[#allocation5] ss:$8 sm:$0x3] %vm433, 0.0
    %957 = vst.msk [vmem:[#allocation5] ss:$8 sm:$0x0] %vm433, 0.0
    %s958 = scalar_lea.vmem [#allocation5], 16
    %959 = vst.msk [vmem:[%s958] ss:$8 sm:$0x3] %vm433, 0.0
    %960 = vst.msk [vmem:[%s958] ss:$8 sm:$0x0] %vm433, 0.0
    %s961 = scalar_lea.vmem [#allocation5], 5
    %962 = vst.msk [vmem:[%s961] ss:$8 sm:$0x3] %vm433, 0.0
    %963 = vst.msk [vmem:[%s961] ss:$8 sm:$0x0] %vm433, 0.0
    %s964 = scalar_lea.vmem [#allocation5], 21
    %965 = vst.msk [vmem:[%s964] ss:$8 sm:$0x3] %vm433, 0.0
    %966 = vst.msk [vmem:[%s964] ss:$8 sm:$0x0] %vm433, 0.0
    %vm967 = vcmask 258049
    %968 = vst.msk [vmem:[#allocation5] sm:$0x1e] %vm967, 0.0
    %969 = vst.msk [vmem:[#allocation5 + $0x10] sm:$0x1e] %vm967, 0.0
    %vm970 = vcmask 520449
    %971 = vst.msk [vmem:[#allocation5 + $0x8] sm:$0x1e] %vm970, 0.0
    %972 = vst.msk [vmem:[#allocation5 + $0x18] sm:$0x1e] %vm970, 0.0
    %v974 = vcombine.high %v955, %v955
    %v975 = vrot.slane %v955, 7
    %v976 = vrot.slane %v974, 7
    %977 = vrot.lane.b32.xlu0 %v975, 32
    %v978 = vpop.permute.xlu0 %977
    %979 = vrot.lane.b32.xlu0 %v976, 32
    %v980 = vpop.permute.xlu0 %979
    %vm983 = vcmask 1044737
    %984 = vst.msk [vmem:[#allocation5] sm:$0x1e] %vm983, %v978
    %985 = vst.msk [vmem:[#allocation5 + $0x8] sm:$0x1e] %vm967, %v978
    %986 = vst.msk [vmem:[#allocation5 + $0x10] sm:$0x1e] %vm983, %v980
    %987 = vst.msk [vmem:[#allocation5 + $0x18] sm:$0x1e] %vm967, %v980
    %v988 = vld [vmem:[#allocation5] sm:$0xf]
    %v989 = vld [vmem:[#allocation5 + $0x8] sm:$0xf]
    %v990 = vld [vmem:[#allocation5 + $0x10] sm:$0xf]
    %v991 = vld [vmem:[#allocation5 + $0x18] sm:$0xf]
    %v996 = vcombine.low %v988, %v989
    %v997 = vcombine.low %v990, %v991
    %v998 = vld [vmem:[%s5] sm:$0xff]
    %v999 = vld [vmem:[%s5 + $0x8] sm:$0xff]
    %v1000 = vld [vmem:[%s5 + $0x10] sm:$0xff]
    %v1001 = vld [vmem:[%s5 + $0x18] sm:$0xff]
    %v1002 = vld [vmem:[%s5 + $0x20] sm:$0xff]
    %v1003 = vld [vmem:[%s5 + $0x28] sm:$0xff]
    %v1004 = vld [vmem:[%s5 + $0x30] sm:$0xff]
    %v1005 = vld [vmem:[%s5 + $0x38] sm:$0xff]
    %v1006 = vld [vmem:[%s5 + $0x40] sm:$0xff]
    %v1007 = vld [vmem:[%s5 + $0x48] sm:$0xff]
    %v1008 = vld [vmem:[%s5 + $0x50] sm:$0xff]
    %v1009 = vld [vmem:[%s5 + $0x58] sm:$0xff]
    %v1010 = vld [vmem:[%s5 + $0x60] sm:$0xff]
    %v1011 = vld [vmem:[%s5 + $0x68] sm:$0xff]
    %v1012 = vld [vmem:[%s5 + $0x70] sm:$0xff]
    %v1013 = vld [vmem:[%s5 + $0x78] sm:$0xff]
    %v1014 = vld [vmem:[%s5 + $0x80] sm:$0xff]
    %v1015 = vld [vmem:[%s5 + $0x88] sm:$0xff]
    %v1016 = vld [vmem:[%s5 + $0x90] sm:$0xff]
    %v1017 = vld [vmem:[%s5 + $0x98] sm:$0xff]
    %v1018 = vld [vmem:[%s5 + $0xa0] sm:$0xff]
    %v1019 = vld [vmem:[%s5 + $0xa8] sm:$0xff]
    %v1020 = vld [vmem:[%s5 + $0xb0] sm:$0xff]
    %v1021 = vld [vmem:[%s5 + $0xb8] sm:$0xff]
    %v1022 = vld [vmem:[%s5 + $0xc0] sm:$0xff]
    %v1023 = vld [vmem:[%s5 + $0xc8] sm:$0xff]
    %v1024 = vld [vmem:[%s5 + $0xd0] sm:$0xff]
    %v1025 = vld [vmem:[%s5 + $0xd8] sm:$0xff]
    %v1026 = vld [vmem:[%s5 + $0xe0] sm:$0xff]
    %v1027 = vld [vmem:[%s5 + $0xe8] sm:$0xff]
    %v1028 = vld [vmem:[%s5 + $0xf0] sm:$0xff]
    %v1029 = vld [vmem:[%s5 + $0xf8] sm:$0xff]
    %v1030 = vld [vmem:[%s5 + $0x100] sm:$0xff]
    %v1031 = vld [vmem:[%s5 + $0x108] sm:$0xff]
    %v1032 = vld [vmem:[%s5 + $0x110] sm:$0xff]
    %v1033 = vld [vmem:[%s5 + $0x118] sm:$0xff]
    %v1034 = vld [vmem:[%s5 + $0x120] sm:$0xff]
    %v1035 = vld [vmem:[%s5 + $0x128] sm:$0xff]
    %v1036 = vld [vmem:[%s5 + $0x130] sm:$0xff]
    %v1037 = vld [vmem:[%s5 + $0x138] sm:$0xff]
    %v1038 = vld [vmem:[%s5 + $0x140] sm:$0xff]
    %v1039 = vld [vmem:[%s5 + $0x148] sm:$0xff]
    %v1040 = vld [vmem:[%s5 + $0x150] sm:$0xff]
    %v1041 = vld [vmem:[%s5 + $0x158] sm:$0xff]
    %v1042 = vld [vmem:[%s5 + $0x160] sm:$0xff]
    %v1043 = vld [vmem:[%s5 + $0x168] sm:$0xff]
    %v1044 = vld [vmem:[%s5 + $0x170] sm:$0xff]
    %v1045 = vld [vmem:[%s5 + $0x178] sm:$0xff]
    %v1046 = vld [vmem:[#allocation5] sm:$0x1e]
    %v1047 = vld [vmem:[#allocation5 + $0x8] sm:$0x1e]
    %v1048 = vld [vmem:[#allocation5 + $0x10] sm:$0x1e]
    %v1049 = vld [vmem:[#allocation5 + $0x18] sm:$0x1e]
    %v1054 = vcombine.low %v1046, %v1047
    %v1055 = vcombine.high %v1046, %v1047
    %v1056 = vcombine.low %v1048, %v1049
    %v1057 = vcombine.high %v1048, %v1049
    %vm1058 = vcmask 1042432
    %vm1059 = vcmask 1046532
    %vm1060 = vmor %vm1058, %vm1059
    %v1061 = vrot.slane %v1054, 5
    %v1062 = vrot.slane %v1061, 4
    %v1063 = vrot.slane %v1055, 5
    %v1064 = vsel %vm1060, %v1062, %v1063
    %v1065 = vrot.slane %v1056, 5
    %v1066 = vrot.slane %v1065, 4
    %v1067 = vrot.slane %v1057, 5
    %v1068 = vsel %vm1060, %v1066, %v1067
    %s1069 = scalar_lea.vmem %s5, 384
    %v1070 = vld [vmem:[%s1069] sm:$0xff]
    %v1071 = vld [vmem:[%s1069 + $0x8] sm:$0xff]
    %v1072 = vld [vmem:[%s1069 + $0x10] sm:$0xff]
    %v1073 = vld [vmem:[%s1069 + $0x18] sm:$0xff]
    %v1074 = vld [vmem:[%s1069 + $0x20] sm:$0xff]
    %v1075 = vld [vmem:[%s1069 + $0x28] sm:$0xff]
    %v1076 = vld [vmem:[%s1069 + $0x30] sm:$0xff]
    %v1077 = vld [vmem:[%s1069 + $0x38] sm:$0xff]
    %v1078 = vld [vmem:[%s1069 + $0x40] sm:$0xff]
    %v1079 = vld [vmem:[%s1069 + $0x48] sm:$0xff]
    %v1080 = vld [vmem:[%s1069 + $0x50] sm:$0xff]
    %v1081 = vld [vmem:[%s1069 + $0x58] sm:$0xff]
    %v1082 = vld [vmem:[%s1069 + $0x60] sm:$0xff]
    %v1083 = vld [vmem:[%s1069 + $0x68] sm:$0xff]
    %v1084 = vld [vmem:[%s1069 + $0x70] sm:$0xff]
    %v1085 = vld [vmem:[%s1069 + $0x78] sm:$0xff]
    %v1086 = vld [vmem:[%s1069 + $0x80] sm:$0xff]
    %v1087 = vld [vmem:[%s1069 + $0x88] sm:$0xff]
    %v1088 = vld [vmem:[%s1069 + $0x90] sm:$0xff]
    %v1089 = vld [vmem:[%s1069 + $0x98] sm:$0xff]
    %v1090 = vld [vmem:[%s1069 + $0xa0] sm:$0xff]
    %v1091 = vld [vmem:[%s1069 + $0xa8] sm:$0xff]
    %v1092 = vld [vmem:[%s1069 + $0xb0] sm:$0xff]
    %v1093 = vld [vmem:[%s1069 + $0xb8] sm:$0xff]
    %v1094 = vld [vmem:[%s1069 + $0xc0] sm:$0xff]
    %v1095 = vld [vmem:[%s1069 + $0xc8] sm:$0xff]
    %v1096 = vld [vmem:[%s1069 + $0xd0] sm:$0xff]
    %v1097 = vld [vmem:[%s1069 + $0xd8] sm:$0xff]
    %v1098 = vld [vmem:[%s1069 + $0xe0] sm:$0xff]
    %v1099 = vld [vmem:[%s1069 + $0xe8] sm:$0xff]
    %v1100 = vld [vmem:[%s1069 + $0xf0] sm:$0xff]
    %v1101 = vld [vmem:[%s1069 + $0xf8] sm:$0xff]
    %v1102 = vld [vmem:[%s1069 + $0x100] sm:$0xff]
    %v1103 = vld [vmem:[%s1069 + $0x108] sm:$0xff]
    %v1104 = vld [vmem:[%s1069 + $0x110] sm:$0xff]
    %v1105 = vld [vmem:[%s1069 + $0x118] sm:$0xff]
    %v1106 = vld [vmem:[%s1069 + $0x120] sm:$0xff]
    %v1107 = vld [vmem:[%s1069 + $0x128] sm:$0xff]
    %v1108 = vld [vmem:[%s1069 + $0x130] sm:$0xff]
    %v1109 = vld [vmem:[%s1069 + $0x138] sm:$0xff]
    %v1110 = vld [vmem:[%s1069 + $0x140] sm:$0xff]
    %v1111 = vld [vmem:[%s1069 + $0x148] sm:$0xff]
    %v1112 = vld [vmem:[%s1069 + $0x150] sm:$0xff]
    %v1113 = vld [vmem:[%s1069 + $0x158] sm:$0xff]
    %v1114 = vld [vmem:[%s1069 + $0x160] sm:$0xff]
    %v1115 = vld [vmem:[%s1069 + $0x168] sm:$0xff]
    %v1116 = vld [vmem:[%s1069 + $0x170] sm:$0xff]
    %v1117 = vld [vmem:[%s1069 + $0x178] sm:$0xff]
    %v1118 = vcombine.low %v1064, %v1068
    %v1119 = vcombine.high %v1064, %v1068
    %v1121 = vsel %vm609, %v1119, 0
    %1123 = vmatprep.subr.mxu0 %v1071
    %1124 = vmatpush1.msra.mxu0 %v1070
    %1125 = vmatprep.subr.mxu0 %v1073
    %1126 = vmatpush1.msra.mxu0 %v1072
    %1127 = vmatprep.subr.mxu0 %v1075
    %1128 = vmatpush1.msra.mxu0 %v1074
    %1129 = vmatprep.subr.mxu0 %v1077
    %1130 = vmatpush1.msra.mxu0 %v1076
    %1131 = vmatprep.subr.mxu0 %v1079
    %1132 = vmatpush1.msra.mxu0 %v1078
    %1133 = vmatprep.subr.mxu0 %v1081
    %1134 = vmatpush1.msra.mxu0 %v1080
    %1135 = vmatprep.subr.mxu0 %v1083
    %1136 = vmatpush1.msra.mxu0 %v1082
    %1137 = vmatprep.subr.mxu0 %v1085
    %1138 = vmatpush1.msra.mxu0 %v1084
    %1139 = vmatprep.subr.mxu0 %v1087
    %1140 = vmatpush1.msra.mxu0 %v1086
    %1141 = vmatprep.subr.mxu0 %v1089
    %1142 = vmatpush1.msra.mxu0 %v1088
    %1143 = vmatprep.subr.mxu0 %v1091
    %1144 = vmatpush1.msra.mxu0 %v1090
    %1145 = vmatprep.subr.mxu0 %v1093
    %1146 = vmatpush1.msra.mxu0 %v1092
    %1147 = vmatprep.subr.mxu0 %v1095
    %1148 = vmatpush1.msra.mxu0 %v1094
    %1149 = vmatprep.subr.mxu0 %v1097
    %1150 = vmatpush1.msra.mxu0 %v1096
    %1151 = vmatprep.subr.mxu0 %v1099
    %1152 = vmatpush1.msra.mxu0 %v1098
    %1153 = vmatprep.subr.mxu0 %v1101
    %1154 = vmatpush1.msra.mxu0 %v1100
    %1155 = vmatprep.subr.mxu0 %v1103
    %1156 = vmatpush1.msra.mxu0 %v1102
    %1157 = vmatprep.subr.mxu0 %v1105
    %1158 = vmatpush1.msra.mxu0 %v1104
    %1159 = vmatprep.subr.mxu0 %v1107
    %1160 = vmatpush1.msra.mxu0 %v1106
    %1161 = vmatprep.subr.mxu0 %v1109
    %1162 = vmatpush1.msra.mxu0 %v1108
    %1163 = vmatprep.subr.mxu0 %v1111
    %1164 = vmatpush1.msra.mxu0 %v1110
    %1165 = vmatprep.subr.mxu0 %v1113
    %1166 = vmatpush1.msra.mxu0 %v1112
    %1167 = vmatprep.subr.mxu0 %v1115
    %1168 = vmatpush1.msra.mxu0 %v1114
    %1169 = vmatprep.subr.mxu0 %v1117
    %1170 = vmatpush1.msra.mxu0 %v1116
    %1171 = vmatprep.subr.mxu0 0.0
    %1172 = vmatpush1.msra.mxu0 0.0
    %1173 = vmatprep.subr.mxu0 0.0
    %1174 = vmatpush1.msra.mxu0 0.0
    %1175 = vmatprep.subr.mxu0 0.0
    %1176 = vmatpush1.msra.mxu0 0.0
    %1177 = vmatprep.subr.mxu0 0.0
    %1178 = vmatpush1.msra.mxu0 0.0
    %1179 = vmatprep.subr.mxu0 0.0
    %1180 = vmatpush1.msra.mxu0 0.0
    %1181 = vmatprep.subr.mxu0 0.0
    %1182 = vmatpush1.msra.mxu0 0.0
    %1183 = vmatprep.subr.mxu0 0.0
    %1184 = vmatpush1.msra.mxu0 0.0
    %1185 = vmatprep.subr.mxu0 0.0
    %1186 = vmatpush1.msra.mxu0 0.0
    %1187 = vmatprep.mubr.f32.mxu0 %v1121
    %1188 = vmatmul.mubr.f32.gmra.mrb[0].mxu0 %v1118
    %v1189 = vpop.f32.mrb[0].mxu0
    %v1190 = vadd.f32 0.0, %v1189
    %v1191 = vpop.f32.mrb[0].mxu0
    %v1192 = vadd.f32 0.0, %v1191
    %1193 = vdwg.mxu0
    %v1194 = vcombine.low %v996, %v997
    %v1195 = vcombine.high %v996, %v997
    %v1197 = vsel %vm609, %v1195, 0
    %1199 = vmatprep.subr.mxu0 %v999
    %1200 = vmatpush1.msra.mxu0 %v998
    %1201 = vmatprep.subr.mxu0 %v1001
    %1202 = vmatpush1.msra.mxu0 %v1000
    %1203 = vmatprep.subr.mxu0 %v1003
    %1204 = vmatpush1.msra.mxu0 %v1002
    %1205 = vmatprep.subr.mxu0 %v1005
    %1206 = vmatpush1.msra.mxu0 %v1004
    %1207 = vmatprep.subr.mxu0 %v1007
    %1208 = vmatpush1.msra.mxu0 %v1006
    %1209 = vmatprep.subr.mxu0 %v1009
    %1210 = vmatpush1.msra.mxu0 %v1008
    %1211 = vmatprep.subr.mxu0 %v1011
    %1212 = vmatpush1.msra.mxu0 %v1010
    %1213 = vmatprep.subr.mxu0 %v1013
    %1214 = vmatpush1.msra.mxu0 %v1012
    %1215 = vmatprep.subr.mxu0 %v1015
    %1216 = vmatpush1.msra.mxu0 %v1014
    %1217 = vmatprep.subr.mxu0 %v1017
    %1218 = vmatpush1.msra.mxu0 %v1016
    %1219 = vmatprep.subr.mxu0 %v1019
    %1220 = vmatpush1.msra.mxu0 %v1018
    %1221 = vmatprep.subr.mxu0 %v1021
    %1222 = vmatpush1.msra.mxu0 %v1020
    %1223 = vmatprep.subr.mxu0 %v1023
    %1224 = vmatpush1.msra.mxu0 %v1022
    %1225 = vmatprep.subr.mxu0 %v1025
    %1226 = vmatpush1.msra.mxu0 %v1024
    %1227 = vmatprep.subr.mxu0 %v1027
    %1228 = vmatpush1.msra.mxu0 %v1026
    %1229 = vmatprep.subr.mxu0 %v1029
    %1230 = vmatpush1.msra.mxu0 %v1028
    %1231 = vmatprep.subr.mxu0 %v1031
    %1232 = vmatpush1.msra.mxu0 %v1030
    %1233 = vmatprep.subr.mxu0 %v1033
    %1234 = vmatpush1.msra.mxu0 %v1032
    %1235 = vmatprep.subr.mxu0 %v1035
    %1236 = vmatpush1.msra.mxu0 %v1034
    %1237 = vmatprep.subr.mxu0 %v1037
    %1238 = vmatpush1.msra.mxu0 %v1036
    %1239 = vmatprep.subr.mxu0 %v1039
    %1240 = vmatpush1.msra.mxu0 %v1038
    %1241 = vmatprep.subr.mxu0 %v1041
    %1242 = vmatpush1.msra.mxu0 %v1040
    %1243 = vmatprep.subr.mxu0 %v1043
    %1244 = vmatpush1.msra.mxu0 %v1042
    %1245 = vmatprep.subr.mxu0 %v1045
    %1246 = vmatpush1.msra.mxu0 %v1044
    %1247 = vmatprep.subr.mxu0 0.0
    %1248 = vmatpush1.msra.mxu0 0.0
    %1249 = vmatprep.subr.mxu0 0.0
    %1250 = vmatpush1.msra.mxu0 0.0
    %1251 = vmatprep.subr.mxu0 0.0
    %1252 = vmatpush1.msra.mxu0 0.0
    %1253 = vmatprep.subr.mxu0 0.0
    %1254 = vmatpush1.msra.mxu0 0.0
    %1255 = vmatprep.subr.mxu0 0.0
    %1256 = vmatpush1.msra.mxu0 0.0
    %1257 = vmatprep.subr.mxu0 0.0
    %1258 = vmatpush1.msra.mxu0 0.0
    %1259 = vmatprep.subr.mxu0 0.0
    %1260 = vmatpush1.msra.mxu0 0.0
    %1261 = vmatprep.subr.mxu0 0.0
    %1262 = vmatpush1.msra.mxu0 0.0
    %1263 = vmatprep.mubr.f32.mxu0 %v1197
    %1264 = vmatmul.mubr.f32.gmra.mrb[0].mxu0 %v1194
    %v1265 = vpop.f32.mrb[0].mxu0
    %v1266 = vadd.f32 %v1190, %v1265
    %v1267 = vpop.f32.mrb[0].mxu0
    %v1268 = vadd.f32 %v1192, %v1267
    %1269 = vdwg.mxu0
    %v1270 = vld [vmem:[#allocation5] sm:$0x3c]
    %v1271 = vld [vmem:[#allocation5 + $0x8] sm:$0x3c]
    %v1272 = vld [vmem:[#allocation5 + $0x10] sm:$0x3c]
    %v1273 = vld [vmem:[#allocation5 + $0x18] sm:$0x3c]
    %v1278 = vcombine.low %v1270, %v1271
    %v1279 = vcombine.high %v1270, %v1271
    %v1280 = vcombine.low %v1272, %v1273
    %v1281 = vcombine.high %v1272, %v1273
    %vm1282 = vcmask 1041408
    %vm1283 = vcmask 1045508
    %vm1284 = vmor %vm1282, %vm1283
    %v1285 = vrot.slane %v1278, 6
    %v1286 = vrot.slane %v1285, 4
    %v1287 = vrot.slane %v1279, 6
    %v1288 = vsel %vm1284, %v1286, %v1287
    %v1289 = vrot.slane %v1280, 6
    %v1290 = vrot.slane %v1289, 4
    %v1291 = vrot.slane %v1281, 6
    %v1292 = vsel %vm1284, %v1290, %v1291
    %s1293 = scalar_lea.vmem %s5, 768
    %v1294 = vld [vmem:[%s1293] sm:$0xff]
    %v1295 = vld [vmem:[%s1293 + $0x8] sm:$0xff]
    %v1296 = vld [vmem:[%s1293 + $0x10] sm:$0xff]
    %v1297 = vld [vmem:[%s1293 + $0x18] sm:$0xff]
    %v1298 = vld [vmem:[%s1293 + $0x20] sm:$0xff]
    %v1299 = vld [vmem:[%s1293 + $0x28] sm:$0xff]
    %v1300 = vld [vmem:[%s1293 + $0x30] sm:$0xff]
    %v1301 = vld [vmem:[%s1293 + $0x38] sm:$0xff]
    %v1302 = vld [vmem:[%s1293 + $0x40] sm:$0xff]
    %v1303 = vld [vmem:[%s1293 + $0x48] sm:$0xff]
    %v1304 = vld [vmem:[%s1293 + $0x50] sm:$0xff]
    %v1305 = vld [vmem:[%s1293 + $0x58] sm:$0xff]
    %v1306 = vld [vmem:[%s1293 + $0x60] sm:$0xff]
    %v1307 = vld [vmem:[%s1293 + $0x68] sm:$0xff]
    %v1308 = vld [vmem:[%s1293 + $0x70] sm:$0xff]
    %v1309 = vld [vmem:[%s1293 + $0x78] sm:$0xff]
    %v1310 = vld [vmem:[%s1293 + $0x80] sm:$0xff]
    %v1311 = vld [vmem:[%s1293 + $0x88] sm:$0xff]
    %v1312 = vld [vmem:[%s1293 + $0x90] sm:$0xff]
    %v1313 = vld [vmem:[%s1293 + $0x98] sm:$0xff]
    %v1314 = vld [vmem:[%s1293 + $0xa0] sm:$0xff]
    %v1315 = vld [vmem:[%s1293 + $0xa8] sm:$0xff]
    %v1316 = vld [vmem:[%s1293 + $0xb0] sm:$0xff]
    %v1317 = vld [vmem:[%s1293 + $0xb8] sm:$0xff]
    %v1318 = vld [vmem:[%s1293 + $0xc0] sm:$0xff]
    %v1319 = vld [vmem:[%s1293 + $0xc8] sm:$0xff]
    %v1320 = vld [vmem:[%s1293 + $0xd0] sm:$0xff]
    %v1321 = vld [vmem:[%s1293 + $0xd8] sm:$0xff]
    %v1322 = vld [vmem:[%s1293 + $0xe0] sm:$0xff]
    %v1323 = vld [vmem:[%s1293 + $0xe8] sm:$0xff]
    %v1324 = vld [vmem:[%s1293 + $0xf0] sm:$0xff]
    %v1325 = vld [vmem:[%s1293 + $0xf8] sm:$0xff]
    %v1326 = vld [vmem:[%s1293 + $0x100] sm:$0xff]
    %v1327 = vld [vmem:[%s1293 + $0x108] sm:$0xff]
    %v1328 = vld [vmem:[%s1293 + $0x110] sm:$0xff]
    %v1329 = vld [vmem:[%s1293 + $0x118] sm:$0xff]
    %v1330 = vld [vmem:[%s1293 + $0x120] sm:$0xff]
    %v1331 = vld [vmem:[%s1293 + $0x128] sm:$0xff]
    %v1332 = vld [vmem:[%s1293 + $0x130] sm:$0xff]
    %v1333 = vld [vmem:[%s1293 + $0x138] sm:$0xff]
    %v1334 = vld [vmem:[%s1293 + $0x140] sm:$0xff]
    %v1335 = vld [vmem:[%s1293 + $0x148] sm:$0xff]
    %v1336 = vld [vmem:[%s1293 + $0x150] sm:$0xff]
    %v1337 = vld [vmem:[%s1293 + $0x158] sm:$0xff]
    %v1338 = vld [vmem:[%s1293 + $0x160] sm:$0xff]
    %v1339 = vld [vmem:[%s1293 + $0x168] sm:$0xff]
    %v1340 = vld [vmem:[%s1293 + $0x170] sm:$0xff]
    %v1341 = vld [vmem:[%s1293 + $0x178] sm:$0xff]
    %v1342 = vcombine.low %v1288, %v1292
    %v1343 = vcombine.high %v1288, %v1292
    %v1345 = vsel %vm609, %v1343, 0
    %1347 = vmatprep.subr.mxu0 %v1295
    %1348 = vmatpush1.msra.mxu0 %v1294
    %1349 = vmatprep.subr.mxu0 %v1297
    %1350 = vmatpush1.msra.mxu0 %v1296
    %1351 = vmatprep.subr.mxu0 %v1299
    %1352 = vmatpush1.msra.mxu0 %v1298
    %1353 = vmatprep.subr.mxu0 %v1301
    %1354 = vmatpush1.msra.mxu0 %v1300
    %1355 = vmatprep.subr.mxu0 %v1303
    %1356 = vmatpush1.msra.mxu0 %v1302
    %1357 = vmatprep.subr.mxu0 %v1305
    %1358 = vmatpush1.msra.mxu0 %v1304
    %1359 = vmatprep.subr.mxu0 %v1307
    %1360 = vmatpush1.msra.mxu0 %v1306
    %1361 = vmatprep.subr.mxu0 %v1309
    %1362 = vmatpush1.msra.mxu0 %v1308
    %1363 = vmatprep.subr.mxu0 %v1311
    %1364 = vmatpush1.msra.mxu0 %v1310
    %1365 = vmatprep.subr.mxu0 %v1313
    %1366 = vmatpush1.msra.mxu0 %v1312
    %1367 = vmatprep.subr.mxu0 %v1315
    %1368 = vmatpush1.msra.mxu0 %v1314
    %1369 = vmatprep.subr.mxu0 %v1317
    %1370 = vmatpush1.msra.mxu0 %v1316
    %1371 = vmatprep.subr.mxu0 %v1319
    %1372 = vmatpush1.msra.mxu0 %v1318
    %1373 = vmatprep.subr.mxu0 %v1321
    %1374 = vmatpush1.msra.mxu0 %v1320
    %1375 = vmatprep.subr.mxu0 %v1323
    %1376 = vmatpush1.msra.mxu0 %v1322
    %1377 = vmatprep.subr.mxu0 %v1325
    %1378 = vmatpush1.msra.mxu0 %v1324
    %1379 = vmatprep.subr.mxu0 %v1327
    %1380 = vmatpush1.msra.mxu0 %v1326
    %1381 = vmatprep.subr.mxu0 %v1329
    %1382 = vmatpush1.msra.mxu0 %v1328
    %1383 = vmatprep.subr.mxu0 %v1331
    %1384 = vmatpush1.msra.mxu0 %v1330
    %1385 = vmatprep.subr.mxu0 %v1333
    %1386 = vmatpush1.msra.mxu0 %v1332
    %1387 = vmatprep.subr.mxu0 %v1335
    %1388 = vmatpush1.msra.mxu0 %v1334
    %1389 = vmatprep.subr.mxu0 %v1337
    %1390 = vmatpush1.msra.mxu0 %v1336
    %1391 = vmatprep.subr.mxu0 %v1339
    %1392 = vmatpush1.msra.mxu0 %v1338
    %1393 = vmatprep.subr.mxu0 %v1341
    %1394 = vmatpush1.msra.mxu0 %v1340
    %1395 = vmatprep.subr.mxu0 0.0
    %1396 = vmatpush1.msra.mxu0 0.0
    %1397 = vmatprep.subr.mxu0 0.0
    %1398 = vmatpush1.msra.mxu0 0.0
    %1399 = vmatprep.subr.mxu0 0.0
    %1400 = vmatpush1.msra.mxu0 0.0
    %1401 = vmatprep.subr.mxu0 0.0
    %1402 = vmatpush1.msra.mxu0 0.0
    %1403 = vmatprep.subr.mxu0 0.0
    %1404 = vmatpush1.msra.mxu0 0.0
    %1405 = vmatprep.subr.mxu0 0.0
    %1406 = vmatpush1.msra.mxu0 0.0
    %1407 = vmatprep.subr.mxu0 0.0
    %1408 = vmatpush1.msra.mxu0 0.0
    %1409 = vmatprep.subr.mxu0 0.0
    %1410 = vmatpush1.msra.mxu0 0.0
    %1411 = vmatprep.mubr.f32.mxu0 %v1345
    %1412 = vmatmul.mubr.f32.gmra.mrb[0].mxu0 %v1342
    %v1413 = vpop.f32.mrb[0].mxu0
    %v1414 = vadd.f32 0.0, %v1413
    %v1415 = vpop.f32.mrb[0].mxu0
    %v1416 = vadd.f32 0.0, %v1415
    %1417 = vdwg.mxu0
    %v1418 = vadd.f32 %v1266, %v1414
    %v1419 = vadd.f32 %v1268, %v1416
    %v1420 = vmax.f32 %v1418, %v1419
    %1421 = vst [vmem:[#allocation6] sm:$0xff] %v1420
    %v1422 = vld [vmem:[#allocation6] ss:$2 sm:$0xf]
    %s1423 = scalar_lea.vmem [#allocation6], 1
    %v1424 = vld [vmem:[%s1423] ss:$2 sm:$0xf]
    %v1425 = vmax.f32 %v1422, %v1424
    %v1426 = vld [vmem:[%s6] sm:$0x1]
    %v1428 = vlaneseq
    %v1429 = vshrl.u32 %v1428, 7
    %v1430 = vsub.s32 0, %v1429
    %v1431 = vrot.slane %v1426, %v1430
    %v1433 = vadd.f32 %v1425, %v1431
    %v1434 = vmax.f32 %v1433, 0.0
    %v1437 = vunpack.c.l.s4 1983009808
    %v1438 = vunpack.c.0.s8 %v1437
    %v1439 = vlaneseq
    %v1440 = vshrl.u32 %v1439, 7
    %v1441 = vsub.s32 %v1438, %v1440
    %v1442 = vrot.slane %v1434, %v1441
    %v1443 = vcombine.high %v1442, %v1442
    %v1444 = vld [vmem:[%s7] sm:$0xff]
    %v1445 = vld [vmem:[%s7 + $0x8] sm:$0xff]
    %v1446 = vld [vmem:[%s7 + $0x10] sm:$0xff]
    %v1447 = vld [vmem:[%s7 + $0x18] sm:$0xff]
    %v1448 = vld [vmem:[%s7 + $0x20] sm:$0xff]
    %v1449 = vld [vmem:[%s7 + $0x28] sm:$0xff]
    %v1450 = vld [vmem:[%s7 + $0x30] sm:$0xff]
    %v1451 = vld [vmem:[%s7 + $0x38] sm:$0xff]
    %v1452 = vld [vmem:[%s7 + $0x40] sm:$0xff]
    %v1453 = vld [vmem:[%s7 + $0x48] sm:$0xff]
    %v1454 = vld [vmem:[%s7 + $0x50] sm:$0xff]
    %v1455 = vld [vmem:[%s7 + $0x58] sm:$0xff]
    %v1456 = vld [vmem:[%s7 + $0x60] sm:$0xff]
    %v1457 = vld [vmem:[%s7 + $0x68] sm:$0xff]
    %v1458 = vld [vmem:[%s7 + $0x70] sm:$0xff]
    %v1459 = vld [vmem:[%s7 + $0x78] sm:$0xff]
    %s1460 = scalar_lea.vmem %s7, 128
    %v1461 = vld [vmem:[%s1460] sm:$0xff]
    %v1462 = vld [vmem:[%s1460 + $0x8] sm:$0xff]
    %v1463 = vld [vmem:[%s1460 + $0x10] sm:$0xff]
    %v1464 = vld [vmem:[%s1460 + $0x18] sm:$0xff]
    %v1465 = vld [vmem:[%s1460 + $0x20] sm:$0xff]
    %v1466 = vld [vmem:[%s1460 + $0x28] sm:$0xff]
    %v1467 = vld [vmem:[%s1460 + $0x30] sm:$0xff]
    %v1468 = vld [vmem:[%s1460 + $0x38] sm:$0xff]
    %v1469 = vld [vmem:[%s1460 + $0x40] sm:$0xff]
    %v1470 = vld [vmem:[%s1460 + $0x48] sm:$0xff]
    %v1471 = vld [vmem:[%s1460 + $0x50] sm:$0xff]
    %v1472 = vld [vmem:[%s1460 + $0x58] sm:$0xff]
    %v1473 = vld [vmem:[%s1460 + $0x60] sm:$0xff]
    %v1474 = vld [vmem:[%s1460 + $0x68] sm:$0xff]
    %v1475 = vld [vmem:[%s1460 + $0x70] sm:$0xff]
    %v1476 = vld [vmem:[%s1460 + $0x78] sm:$0xff]
    %v1477 = vlaneseq
    %v1478 = vshrl.u32 %v1477, 7
    %v1479 = vsub.s32 1, %v1478
    %v1480 = vrot.slane %v1442, %v1479
    %v1481 = vlaneseq
    %v1482 = vshrl.u32 %v1481, 7
    %v1483 = vsub.s32 1, %v1482
    %v1484 = vrot.slane %v1443, %v1483
    %vm1485 = vcmask 1041409
    %v1486 = vsel %vm1485, %v1484, %v1480
    %1488 = vmatprep.subr.mxu0 0.0
    %1489 = vmatpush1.msra.mxu0 %v1461
    %1490 = vmatprep.subr.mxu0 0.0
    %1491 = vmatpush1.msra.mxu0 %v1462
    %1492 = vmatprep.subr.mxu0 0.0
    %1493 = vmatpush1.msra.mxu0 %v1463
    %1494 = vmatprep.subr.mxu0 0.0
    %1495 = vmatpush1.msra.mxu0 %v1464
    %1496 = vmatprep.subr.mxu0 0.0
    %1497 = vmatpush1.msra.mxu0 %v1465
    %1498 = vmatprep.subr.mxu0 0.0
    %1499 = vmatpush1.msra.mxu0 %v1466
    %1500 = vmatprep.subr.mxu0 0.0
    %1501 = vmatpush1.msra.mxu0 %v1467
    %1502 = vmatprep.subr.mxu0 0.0
    %1503 = vmatpush1.msra.mxu0 %v1468
    %1504 = vmatprep.subr.mxu0 0.0
    %1505 = vmatpush1.msra.mxu0 %v1469
    %1506 = vmatprep.subr.mxu0 0.0
    %1507 = vmatpush1.msra.mxu0 %v1470
    %1508 = vmatprep.subr.mxu0 0.0
    %1509 = vmatpush1.msra.mxu0 %v1471
    %1510 = vmatprep.subr.mxu0 0.0
    %1511 = vmatpush1.msra.mxu0 %v1472
    %1512 = vmatprep.subr.mxu0 0.0
    %1513 = vmatpush1.msra.mxu0 %v1473
    %1514 = vmatprep.subr.mxu0 0.0
    %1515 = vmatpush1.msra.mxu0 %v1474
    %1516 = vmatprep.subr.mxu0 0.0
    %1517 = vmatpush1.msra.mxu0 %v1475
    %1518 = vmatprep.subr.mxu0 0.0
    %1519 = vmatpush1.msra.mxu0 %v1476
    %1520 = vmatprep.subr.mxu0 0.0
    %1521 = vmatpush1.msra.mxu0 0.0
    %1522 = vmatprep.subr.mxu0 0.0
    %1523 = vmatpush1.msra.mxu0 0.0
    %1524 = vmatprep.subr.mxu0 0.0
    %1525 = vmatpush1.msra.mxu0 0.0
    %1526 = vmatprep.subr.mxu0 0.0
    %1527 = vmatpush1.msra.mxu0 0.0
    %1528 = vmatprep.subr.mxu0 0.0
    %1529 = vmatpush1.msra.mxu0 0.0
    %1530 = vmatprep.subr.mxu0 0.0
    %1531 = vmatpush1.msra.mxu0 0.0
    %1532 = vmatprep.subr.mxu0 0.0
    %1533 = vmatpush1.msra.mxu0 0.0
    %1534 = vmatprep.subr.mxu0 0.0
    %1535 = vmatpush1.msra.mxu0 0.0
    %1536 = vmatprep.subr.mxu0 0.0
    %1537 = vmatpush1.msra.mxu0 0.0
    %1538 = vmatprep.subr.mxu0 0.0
    %1539 = vmatpush1.msra.mxu0 0.0
    %1540 = vmatprep.subr.mxu0 0.0
    %1541 = vmatpush1.msra.mxu0 0.0
    %1542 = vmatprep.subr.mxu0 0.0
    %1543 = vmatpush1.msra.mxu0 0.0
    %1544 = vmatprep.subr.mxu0 0.0
    %1545 = vmatpush1.msra.mxu0 0.0
    %1546 = vmatprep.subr.mxu0 0.0
    %1547 = vmatpush1.msra.mxu0 0.0
    %1548 = vmatprep.subr.mxu0 0.0
    %1549 = vmatpush1.msra.mxu0 0.0
    %1550 = vmatprep.subr.mxu0 0.0
    %1551 = vmatpush1.msra.mxu0 0.0
    %1552 = vmatprep.mubr.f32.mxu0 0.0
    %1553 = vmatmul.mubr.f32.gmra.mrb[0].mxu0 %v1486
    %v1554 = vpop.f32.mrb[0].mxu0
    %v1555 = vadd.f32 0.0, %v1554
    %v1556 = vpop.f32.mrb[0].mxu0
    %1557 = vdwg.mxu0
    %v1558 = vlaneseq
    %v1559 = vshrl.u32 %v1558, 7
    %v1560 = vsub.s32 0, %v1559
    %v1561 = vrot.slane %v1442, %v1560
    %v1562 = vlaneseq
    %v1563 = vshrl.u32 %v1562, 7
    %v1564 = vsub.s32 0, %v1563
    %v1565 = vrot.slane %v1443, %v1564
    %v1566 = vsel %vm1485, %v1565, %v1561
    %1568 = vmatprep.subr.mxu0 0.0
    %1569 = vmatpush1.msra.mxu0 %v1444
    %1570 = vmatprep.subr.mxu0 0.0
    %1571 = vmatpush1.msra.mxu0 %v1445
    %1572 = vmatprep.subr.mxu0 0.0
    %1573 = vmatpush1.msra.mxu0 %v1446
    %1574 = vmatprep.subr.mxu0 0.0
    %1575 = vmatpush1.msra.mxu0 %v1447
    %1576 = vmatprep.subr.mxu0 0.0
    %1577 = vmatpush1.msra.mxu0 %v1448
    %1578 = vmatprep.subr.mxu0 0.0
    %1579 = vmatpush1.msra.mxu0 %v1449
    %1580 = vmatprep.subr.mxu0 0.0
    %1581 = vmatpush1.msra.mxu0 %v1450
    %1582 = vmatprep.subr.mxu0 0.0
    %1583 = vmatpush1.msra.mxu0 %v1451
    %1584 = vmatprep.subr.mxu0 0.0
    %1585 = vmatpush1.msra.mxu0 %v1452
    %1586 = vmatprep.subr.mxu0 0.0
    %1587 = vmatpush1.msra.mxu0 %v1453
    %1588 = vmatprep.subr.mxu0 0.0
    %1589 = vmatpush1.msra.mxu0 %v1454
    %1590 = vmatprep.subr.mxu0 0.0
    %1591 = vmatpush1.msra.mxu0 %v1455
    %1592 = vmatprep.subr.mxu0 0.0
    %1593 = vmatpush1.msra.mxu0 %v1456
    %1594 = vmatprep.subr.mxu0 0.0
    %1595 = vmatpush1.msra.mxu0 %v1457
    %1596 = vmatprep.subr.mxu0 0.0
    %1597 = vmatpush1.msra.mxu0 %v1458
    %1598 = vmatprep.subr.mxu0 0.0
    %1599 = vmatpush1.msra.mxu0 %v1459
    %1600 = vmatprep.subr.mxu0 0.0
    %1601 = vmatpush1.msra.mxu0 0.0
    %1602 = vmatprep.subr.mxu0 0.0
    %1603 = vmatpush1.msra.mxu0 0.0
    %1604 = vmatprep.subr.mxu0 0.0
    %1605 = vmatpush1.msra.mxu0 0.0
    %1606 = vmatprep.subr.mxu0 0.0
    %1607 = vmatpush1.msra.mxu0 0.0
    %1608 = vmatprep.subr.mxu0 0.0
    %1609 = vmatpush1.msra.mxu0 0.0
    %1610 = vmatprep.subr.mxu0 0.0
    %1611 = vmatpush1.msra.mxu0 0.0
    %1612 = vmatprep.subr.mxu0 0.0
    %1613 = vmatpush1.msra.mxu0 0.0
    %1614 = vmatprep.subr.mxu0 0.0
    %1615 = vmatpush1.msra.mxu0 0.0
    %1616 = vmatprep.subr.mxu0 0.0
    %1617 = vmatpush1.msra.mxu0 0.0
    %1618 = vmatprep.subr.mxu0 0.0
    %1619 = vmatpush1.msra.mxu0 0.0
    %1620 = vmatprep.subr.mxu0 0.0
    %1621 = vmatpush1.msra.mxu0 0.0
    %1622 = vmatprep.subr.mxu0 0.0
    %1623 = vmatpush1.msra.mxu0 0.0
    %1624 = vmatprep.subr.mxu0 0.0
    %1625 = vmatpush1.msra.mxu0 0.0
    %1626 = vmatprep.subr.mxu0 0.0
    %1627 = vmatpush1.msra.mxu0 0.0
    %1628 = vmatprep.subr.mxu0 0.0
    %1629 = vmatpush1.msra.mxu0 0.0
    %1630 = vmatprep.subr.mxu0 0.0
    %1631 = vmatpush1.msra.mxu0 0.0
    %1632 = vmatprep.mubr.f32.mxu0 0.0
    %1633 = vmatmul.mubr.f32.gmra.mrb[0].mxu0 %v1566
    %v1634 = vpop.f32.mrb[0].mxu0
    %v1635 = vadd.f32 %v1555, %v1634
    %v1636 = vpop.f32.mrb[0].mxu0
    %1637 = vdwg.mxu0
    %v1638 = vld [vmem:[%s8] sm:$0x1]
    %v1640 = vlaneseq
    %v1641 = vshrl.u32 %v1640, 7
    %v1642 = vsub.s32 0, %v1641
    %v1643 = vrot.slane %v1638, %v1642
    %v1645 = vadd.f32 %v1635, %v1643
    %v1646 = vmax.f32 %v1645, 0.0
    %v1647 = vld [vmem:[%s9] sm:$0xff]
    %v1648 = vld [vmem:[%s9 + $0x8] sm:$0xff]
    %v1649 = vld [vmem:[%s9 + $0x10] sm:$0xff]
    %v1650 = vld [vmem:[%s9 + $0x18] sm:$0xff]
    %v1651 = vld [vmem:[%s9 + $0x20] sm:$0xff]
    %v1652 = vld [vmem:[%s9 + $0x28] sm:$0xff]
    %v1653 = vld [vmem:[%s9 + $0x30] sm:$0xff]
    %v1654 = vld [vmem:[%s9 + $0x38] sm:$0xff]
    %v1655 = vld [vmem:[%s9 + $0x40] sm:$0xff]
    %v1656 = vld [vmem:[%s9 + $0x48] sm:$0xff]
    %v1657 = vld [vmem:[%s9 + $0x50] sm:$0xff]
    %v1658 = vld [vmem:[%s9 + $0x58] sm:$0xff]
    %v1659 = vld [vmem:[%s9 + $0x60] sm:$0xff]
    %v1660 = vld [vmem:[%s9 + $0x68] sm:$0xff]
    %v1661 = vld [vmem:[%s9 + $0x70] sm:$0xff]
    %v1662 = vld [vmem:[%s9 + $0x78] sm:$0xff]
    %v1663 = vld [vmem:[%s10] sm:$0x1]
    %v1665 = vlaneseq
    %v1666 = vshrl.u32 %v1665, 7
    %v1667 = vsub.s32 0, %v1666
    %v1668 = vrot.slane %v1663, %v1667
    %1670 = vmatprep.subr.mxu0 0.0
    %1671 = vmatpush1.msra.mxu0 %v1647
    %1672 = vmatprep.subr.mxu0 0.0
    %1673 = vmatpush1.msra.mxu0 %v1648
    %1674 = vmatprep.subr.mxu0 0.0
    %1675 = vmatpush1.msra.mxu0 %v1649
    %1676 = vmatprep.subr.mxu0 0.0
    %1677 = vmatpush1.msra.mxu0 %v1650
    %1678 = vmatprep.subr.mxu0 0.0
    %1679 = vmatpush1.msra.mxu0 %v1651
    %1680 = vmatprep.subr.mxu0 0.0
    %1681 = vmatpush1.msra.mxu0 %v1652
    %1682 = vmatprep.subr.mxu0 0.0
    %1683 = vmatpush1.msra.mxu0 %v1653
    %1684 = vmatprep.subr.mxu0 0.0
    %1685 = vmatpush1.msra.mxu0 %v1654
    %1686 = vmatprep.subr.mxu0 0.0
    %1687 = vmatpush1.msra.mxu0 %v1655
    %1688 = vmatprep.subr.mxu0 0.0
    %1689 = vmatpush1.msra.mxu0 %v1656
    %1690 = vmatprep.subr.mxu0 0.0
    %1691 = vmatpush1.msra.mxu0 %v1657
    %1692 = vmatprep.subr.mxu0 0.0
    %1693 = vmatpush1.msra.mxu0 %v1658
    %1694 = vmatprep.subr.mxu0 0.0
    %1695 = vmatpush1.msra.mxu0 %v1659
    %1696 = vmatprep.subr.mxu0 0.0
    %1697 = vmatpush1.msra.mxu0 %v1660
    %1698 = vmatprep.subr.mxu0 0.0
    %1699 = vmatpush1.msra.mxu0 %v1661
    %1700 = vmatprep.subr.mxu0 0.0
    %1701 = vmatpush1.msra.mxu0 %v1662
    %1702 = vmatprep.subr.mxu0 0.0
    %1703 = vmatpush1.msra.mxu0 0.0
    %1704 = vmatprep.subr.mxu0 0.0
    %1705 = vmatpush1.msra.mxu0 0.0
    %1706 = vmatprep.subr.mxu0 0.0
    %1707 = vmatpush1.msra.mxu0 0.0
    %1708 = vmatprep.subr.mxu0 0.0
    %1709 = vmatpush1.msra.mxu0 0.0
    %1710 = vmatprep.subr.mxu0 0.0
    %1711 = vmatpush1.msra.mxu0 0.0
    %1712 = vmatprep.subr.mxu0 0.0
    %1713 = vmatpush1.msra.mxu0 0.0
    %1714 = vmatprep.subr.mxu0 0.0
    %1715 = vmatpush1.msra.mxu0 0.0
    %1716 = vmatprep.subr.mxu0 0.0
    %1717 = vmatpush1.msra.mxu0 0.0
    %1718 = vmatprep.subr.mxu0 0.0
    %1719 = vmatpush1.msra.mxu0 0.0
    %1720 = vmatprep.subr.mxu0 0.0
    %1721 = vmatpush1.msra.mxu0 0.0
    %1722 = vmatprep.subr.mxu0 0.0
    %1723 = vmatpush1.msra.mxu0 0.0
    %1724 = vmatprep.subr.mxu0 0.0
    %1725 = vmatpush1.msra.mxu0 0.0
    %1726 = vmatprep.subr.mxu0 0.0
    %1727 = vmatpush1.msra.mxu0 0.0
    %1728 = vmatprep.subr.mxu0 0.0
    %1729 = vmatpush1.msra.mxu0 0.0
    %1730 = vmatprep.subr.mxu0 0.0
    %1731 = vmatpush1.msra.mxu0 0.0
    %1732 = vmatprep.subr.mxu0 0.0
    %1733 = vmatpush1.msra.mxu0 0.0
    %1734 = vmatprep.mubr.f32.mxu0 0.0
    %1735 = vmatmul.mubr.f32.gmra.mrb[0].mxu0 %v1646
    %v1736 = vpop.f32.mrb[0].mxu0
    %v1737 = vadd.f32 %v1668, %v1736
    %v1738 = vpop.f32.mrb[0].mxu0
    %1739 = vdwg.mxu0
    %1740 = vst [vmem:[#allocation7] sm:$0x3] %v1737
    // Predicated region
    $region46: #{simple_cnn_forward.1} parent=1 // pred_check
      _
    $region47: #{simple_cnn_forward.1} parent=1 // pred_check_branch
      %1742 = sbr.rel (0) target = $region49
    $region48: #{simple_cnn_forward.1} parent=1 // pred_region
      %s1744 = ssub.s32 32, 32
      %1745 = vsyncadd [#allocation8], %s1744
      %s1747 = sshll.u32 [#allocation7], 4
      %s1748 = int_to_ptr.vmem [resolvable:$true] %s1747
      %1750 = dma.vmem_to_hbm [thread:$0]  %s1748, 32, %s11, [#allocation8]
    $region49: #{simple_cnn_forward.1} parent=1 // pred_fallthru
      _
    // Predicated region
    $region50: #{simple_cnn_forward.1} parent=1 // pred_check
      _
    $region51: #{simple_cnn_forward.1} parent=1 // pred_check_branch
      %1752 = sbr.rel (0) target = $region53
    $region52: #{simple_cnn_forward.1} parent=1 // pred_region
      %1753 = dma.done [#allocation8], 32
    $region53: #{simple_cnn_forward.1} parent=1 // pred_fallthru
      _
    %1754 = vsyncpa [#allocation8], 1

</llo_original>
